<compile_context>
chip_gen: v7x
topology: tpu7x:2x2x1
jax: 0.10.0
libtpu: 0.0.40
codegen_flags: <defaults>
</compile_context>

<pallas_src>
import functools
import math

import jax
import jax.numpy as jnp
from jax.experimental import pallas as pl
from jax.experimental.pallas import tpu as pltpu

# Small, forward-consistent hyper-parameters.
INPUT_DIM = 32
HIDDEN_DIM = 32
NUM_LAYERS = 2          # the wavefront kernel is specialised for 2 stacked layers
ATT_DIM = 64
CLS_DIM = 64
BN_EPS = 1e-5
MXU_DTYPE = jnp.bfloat16   # matmul-operand dtype (f32 accumulation everywhere)


def _round_up(v, m):
    return (v + m - 1) // m * m


# ---------- packed-parameter slab layout (shared by prepare_params & kernel) ----------
_H4 = 4 * HIDDEN_DIM                 # 128: per-layer gate width (i, f, g, o)
_H8 = 8 * HIDDEN_DIM                 # 256: fused two-layer gate width
_AC = 128                            # attention / classifier projections zero-padded to 128 lanes

# bf16 weight slab: row offsets are multiples of 16 (bf16 sublane tile).
_R_WIH1 = 0                                              # (D,  4H)  layer-1 input projection
_R_WBIG = _round_up(_R_WIH1 + INPUT_DIM, 16)             # (2H, 8H)  wavefront block weight
_R_WA1 = _round_up(_R_WBIG + 2 * HIDDEN_DIM, 16)         # (H,  128) attention L1 (padded)
_R_WC1 = _round_up(_R_WA1 + HIDDEN_DIM, 16)              # (H,  128) classifier L1 (BN folded, padded)
_R_END = _round_up(_R_WC1 + HIDDEN_DIM, 16)
_W_COLS = _H8                                            # 256

# f32 slab: one (8, 128) vreg holding every small bias / row-vector.
_F_BIAS1, _F_BIAS2, _F_BA1, _F_WA2, _F_BC1, _F_WC2, _F_BC2 = range(7)


def _fall_lstm_kernel(T, BB, x_ref, w_ref, f_ref, out_ref, gates1_ref, lo_ref):
    """Whole forward pass for one batch block.

    x_ref      : (T*BB, D)      f32   time-major rows (row = t*BB + b)
    w_ref      : (_R_END, 256)  bf16  packed MXU weights
    f_ref      : (8, 128)       f32   packed biases / row weights
    out_ref    : (BB, 1)        f32   sigmoid probabilities
    gates1_ref : (T*BB, 4H)     f32   hoisted layer-1 gate pre-activations (scratch)
    lo_ref     : (T*BB, H)      f32   layer-2 hidden states feeding attention (scratch)
    """
    H = HIDDEN_DIM
    lane_dense = BB <= 8

    # ---- unpack the two parameter slabs (static ref windows, 2 DMAs total) ----
    w_ih1 = w_ref[_R_WIH1:_R_WIH1 + INPUT_DIM, 0:_H4]      # (D, 4H)   bf16
    w_big = w_ref[_R_WBIG:_R_WBIG + 2 * H, 0:_H8]          # (2H, 8H)  bf16
    w_a1 = w_ref[_R_WA1:_R_WA1 + H, 0:_AC]                 # (H, 128)  bf16 (cols >= ATT_DIM are zero)
    w_c1 = w_ref[_R_WC1:_R_WC1 + H, 0:_AC]                 # (H, 128)  bf16 (BN folded; padded)

    fv = f_ref[...]                                        # (8, 128) f32, one vreg
    bias1 = fv[_F_BIAS1:_F_BIAS1 + 1, 0:_H4]               # (1, 4H) = b_ih1 + b_hh1
    bias2 = fv[_F_BIAS2:_F_BIAS2 + 1, 0:_H4]               # (1, 4H) = b_ih2 + b_hh2
    ba1 = fv[_F_BA1:_F_BA1 + 1, 0:_AC]                     # (1, 128)
    wa2 = fv[_F_WA2:_F_WA2 + 1, 0:_AC]                     # (1, 128) attention L2 row
    bc1 = fv[_F_BC1:_F_BC1 + 1, 0:_AC]                     # (1, 128) classifier L1 bias (BN folded)
    wc2 = fv[_F_WC2:_F_WC2 + 1, 0:_AC]                     # (1, 128) classifier L2 row
    bc2 = fv[_F_BC2:_F_BC2 + 1, 0:1]                       # (1, 1)

    # Hoist broadcasts out of the unrolled recurrence (JAX does not CSE broadcast_in_dim).
    bias2_b = jnp.broadcast_to(bias2, (BB, _H4))

    # Layer-1 input projection for the whole sequence with its bias folded in:
    # one batched (T*BB, D) @ (D, 4H) MXU pass.
    gates1_ref[...] = (
        jnp.dot(x_ref[...].astype(MXU_DTYPE), w_ih1, preferred_element_type=jnp.float32)
        + bias1)

    def cell(g, c):
        # PyTorch gate order i, f, g, o along the 4H lane axis.
        if lane_dense:
            # Whole (BB,4H) tile is <= 1 vreg: one sigmoid + one tanh pass is optimal.
            sig = jax.nn.sigmoid(g)
            tnh = jnp.tanh(g)
            i_g, f_g, o_g = sig[:, 0:H], sig[:, H:2 * H], sig[:, 3 * H:4 * H]
            g_g = tnh[:, 2 * H:3 * H]
        else:
            # Large batch blocks: only run each transcendental on the lanes that need it.
            i_g = jax.nn.sigmoid(g[:, 0:H])
            f_g = jax.nn.sigmoid(g[:, H:2 * H])
            o_g = jax.nn.sigmoid(g[:, 3 * H:4 * H])
            g_g = jnp.tanh(g[:, 2 * H:3 * H])
        c_new = f_g * c + i_g * g_g
        return o_g * jnp.tanh(c_new), c_new

    # --------- wavefronted 2-layer recurrence: T+1 supersteps, fully unrolled ---------
    zeros_h = jnp.zeros((BB, H), jnp.float32)

    # Superstep 0: layer-1 step 0 (h1_{-1}=0 -> recurrent term vanishes, no matmul).
    h1, c1 = cell(gates1_ref[0:BB, :], zeros_h)
    h2, c2 = zeros_h, zeros_h

    # Supersteps 1..T-1: layer-1 step s and layer-2 step s-1 share one fused
    # block-diagonal matmul:  [h1_{s-1} | h2_{s-2}] @ [[Whh1, Wih2], [0, Whh2]].
    for s in range(1, T):
        lhs = jnp.concatenate([h1, h2], axis=-1).astype(MXU_DTYPE)          # (BB, 2H)
        fused = jnp.dot(lhs, w_big, preferred_element_type=jnp.float32)     # (BB, 8H)
        g1 = gates1_ref[s * BB:(s + 1) * BB, :] + fused[:, 0:_H4]           # layer-1 step s
        g2 = fused[:, _H4:_H8] + bias2_b                                    # layer-2 step s-1
        n_h2, n_c2 = cell(g2, c2)
        n_h1, n_c1 = cell(g1, c1)
        lo_ref[(s - 1) * BB:s * BB, :] = n_h2
        h1, c1, h2, c2 = n_h1, n_c1, n_h2, n_c2

    # Final superstep: layer-2 step T-1 (layer-1 already finished).
    lhs = jnp.concatenate([h1, h2], axis=-1).astype(MXU_DTYPE)
    fused = jnp.dot(lhs, w_big, preferred_element_type=jnp.float32)
    h2, c2 = cell(fused[:, _H4:_H8] + bias2_b, c2)
    lo_ref[(T - 1) * BB:T * BB, :] = h2

    # TODO(synk): inter-layer Dropout(0.2) is identity in eval mode; training-mode
    #             stochastic dropout is not implemented.

    # ------ attention: Linear(H,64) -> Tanh -> Linear(64,1) -> softmax over time ------
    lo_all = lo_ref[...]                                                    # (T*BB, H) f32
    a_h = jnp.tanh(
        jnp.dot(lo_all.astype(MXU_DTYPE), w_a1, preferred_element_type=jnp.float32)
        + ba1)                                                              # (T*BB, 128)
    # Single-output second layer as a lane reduction; ba2 dropped (cancels in softmax).
    scores = jnp.sum(a_h * wa2, axis=-1, keepdims=True)                     # (T*BB, 1)

    # Per-sample softmax over time + weighted sum (exact, max-subtracted).  T is
    # small; fully unrolled with static slices (restructure to a (BB, T) lane
    # layout only if T ever grows to >= 32).
    m = scores[0:BB, :]
    for t in range(1, T):
        m = jnp.maximum(m, scores[t * BB:(t + 1) * BB, :])
    den = jnp.zeros((BB, 1), jnp.float32)
    ctx = jnp.zeros((BB, H), jnp.float32)
    for t in range(T):
        e_t = jnp.exp(scores[t * BB:(t + 1) * BB, :] - m)                   # (BB, 1)
        den = den + e_t
        ctx = ctx + e_t * lo_all[t * BB:(t + 1) * BB, :]
    context = ctx / den                                                     # (BB, H)

    # ------ classifier: Linear(+folded BatchNorm) -> ReLU -> Dropout(id) -> Linear -> Sigmoid
    h1c = (jnp.dot(context.astype(MXU_DTYPE), w_c1, preferred_element_type=jnp.float32)
           + bc1)                                                           # (BB, 128)
    h1c = jnp.maximum(h1c, 0.0)
    logits = jnp.sum(h1c * wc2, axis=-1, keepdims=True) + bc2               # (BB, 1)
    out_ref[...] = jax.nn.sigmoid(logits)


def prepare_params(params, mxu_dtype=MXU_DTYPE):
    """One-time parameter prep (run OUTSIDE the jitted forward).

    Builds two slabs:
      * bf16 weight slab (MXU operands): layer-1 input projection, the wavefront
        block-diagonal recurrence weight, attention L1 and the BN-folded
        classifier L1 (both zero-padded to 128 output lanes).
      * one (8, 128) f32 vreg with every small bias / row weight (ba2 dropped:
        it cancels exactly in the softmax over time).
    """
    f32 = jnp.float32
    H, D, A, C = HIDDEN_DIM, INPUT_DIM, ATT_DIM, CLS_DIM
    assert len(params["lstm"]) == 2, "wavefront kernel is specialised for num_layers=2"
    assert A <= _AC and C <= _AC

    (w_ih1, w_hh1, b_ih1, b_hh1) = params["lstm"][0]
    (w_ih2, w_hh2, b_ih2, b_hh2) = params["lstm"][1]

    # Block-diagonal wavefront weight: [h1 | h2] @ [[Whh1^T, Wih2^T], [0, Whh2^T]].
    w_big = jnp.zeros((2 * H, _H8), f32)
    w_big = w_big.at[0:H, 0:_H4].set(jnp.transpose(w_hh1))
    w_big = w_big.at[0:H, _H4:_H8].set(jnp.transpose(w_ih2))
    w_big = w_big.at[H:2 * H, _H4:_H8].set(jnp.transpose(w_hh2))

    # Fold eval-mode BatchNorm1d into the first classifier Linear.
    scale = params["bn_gamma"] / jnp.sqrt(params["bn_var"] + BN_EPS)        # (C,)
    wc1_f = params["wc1"] * scale[:, None]                                  # (C, H)
    bc1_f = (params["bc1"] - params["bn_mean"]) * scale + params["bn_beta"]  # (C,)

    # bf16 weight slab.
    wslab = jnp.zeros((_R_END, _W_COLS), f32)
    wslab = wslab.at[_R_WIH1:_R_WIH1 + D, 0:_H4].set(jnp.transpose(w_ih1))
    wslab = wslab.at[_R_WBIG:_R_WBIG + 2 * H, 0:_H8].set(w_big)
    wslab = wslab.at[_R_WA1:_R_WA1 + H, 0:A].set(jnp.transpose(params["wa1"]))
    wslab = wslab.at[_R_WC1:_R_WC1 + H, 0:C].set(jnp.transpose(wc1_f))
    wslab = wslab.astype(mxu_dtype)

    # f32 bias / row-vector slab (one vreg).
    fslab = jnp.zeros((8, 128), f32)
    fslab = fslab.at[_F_BIAS1, 0:_H4].set(b_ih1 + b_hh1)
    fslab = fslab.at[_F_BIAS2, 0:_H4].set(b_ih2 + b_hh2)
    fslab = fslab.at[_F_BA1, 0:A].set(params["ba1"])
    fslab = fslab.at[_F_WA2, 0:A].set(params["wa2"].reshape(-1))
    fslab = fslab.at[_F_BC1, 0:C].set(bc1_f)
    fslab = fslab.at[_F_WC2, 0:C].set(params["wc2"].reshape(-1))
    fslab = fslab.at[_F_BC2, 0].set(params["bc2"].reshape(()))
    return wslab, fslab


def _tensorcores_per_chip():
    """v7x exposes 2 TensorCores per chip; v5e / v6e expose 1."""
    try:
        kind = (getattr(jax.devices()[0], "device_kind", "") or "").lower()
    except Exception:
        kind = ""
    return 2 if ("v7" in kind or "7x" in kind) else 1


def _pick_batch_block(B):
    """Batch rows per grid program.

    Single-TC chips (v5e/v6e): never split — the grid is a sequential loop and a
    bigger block fills more MXU sublanes.  On v7x split into exactly 2 'parallel'
    programs, but only when each block still gets a sublane-filling (>=8, %8==0)
    slice; at tiny serving batches (e.g. B=2) keep one program (batch more
    requests per call to use the second core).
    """
    n_tc = _tensorcores_per_chip()
    if n_tc <= 1:
        return B
    bb = B // n_tc
    if B % n_tc == 0 and bb >= 8 and bb % 8 == 0:
        return bb
    return B


@jax.jit
def fall_detection_forward(x, wslab, fslab):
    """x: (B, T, INPUT_DIM) float32 -> (B, 1) float32 probabilities."""
    B, T, D = x.shape
    BB = _pick_batch_block(B)
    nb = B // BB
    H = HIDDEN_DIM

    # Pre-flatten each batch block to time-major rows (row = t*BB + b) in XLA,
    # so the kernel's first MXU op consumes the input directly (no staging loop).
    xb = (x.astype(jnp.float32)
          .reshape(nb, BB, T, D)
          .transpose(0, 2, 1, 3)
          .reshape(nb, T * BB, D))

    kernel = functools.partial(_fall_lstm_kernel, T, BB)
    return pl.pallas_call(
        kernel,
        out_shape=jax.ShapeDtypeStruct((B, 1), jnp.float32),
        grid=(nb,),
        in_specs=[
            pl.BlockSpec((None, T * BB, D), lambda b: (b, 0, 0)),
            pl.BlockSpec(wslab.shape, lambda b: (0, 0)),
            pl.BlockSpec(fslab.shape, lambda b: (0, 0)),
        ],
        out_specs=pl.BlockSpec((BB, 1), lambda b: (b, 0)),
        scratch_shapes=[
            pltpu.VMEM((T * BB, 4 * H), jnp.float32),   # hoisted layer-1 gate pre-activations
            pltpu.VMEM((T * BB, H), jnp.float32),       # layer-2 hidden states (attention input)
        ],
        compiler_params=pltpu.CompilerParams(
            dimension_semantics=("parallel",)),
    )(xb, wslab, fslab)


def init_params(key):
    """Deterministic parameter init mimicking PyTorch default init shapes/ranges."""
    keys = iter(jax.random.split(key, 32))

    def unif(shape, bound):
        return jax.random.uniform(next(keys), shape, jnp.float32, -bound, bound)

    k_lstm = 1.0 / math.sqrt(HIDDEN_DIM)
    lstm = []
    for layer in range(NUM_LAYERS):
        din = INPUT_DIM if layer == 0 else HIDDEN_DIM
        lstm.append((
            unif((4 * HIDDEN_DIM, din), k_lstm),          # weight_ih_l{k}
            unif((4 * HIDDEN_DIM, HIDDEN_DIM), k_lstm),   # weight_hh_l{k}
            unif((4 * HIDDEN_DIM,), k_lstm),              # bias_ih_l{k}
            unif((4 * HIDDEN_DIM,), k_lstm),              # bias_hh_l{k}
        ))

    k_a1 = 1.0 / math.sqrt(HIDDEN_DIM)
    k_a2 = 1.0 / math.sqrt(ATT_DIM)
    k_c1 = 1.0 / math.sqrt(HIDDEN_DIM)
    k_c2 = 1.0 / math.sqrt(CLS_DIM)
    return {
        "lstm": lstm,
        "wa1": unif((ATT_DIM, HIDDEN_DIM), k_a1), "ba1": unif((ATT_DIM,), k_a1),
        "wa2": unif((1, ATT_DIM), k_a2),          "ba2": unif((1,), k_a2),
        "wc1": unif((CLS_DIM, HIDDEN_DIM), k_c1), "bc1": unif((CLS_DIM,), k_c1),
        "bn_gamma": jnp.ones((CLS_DIM,), jnp.float32),
        "bn_beta": jnp.zeros((CLS_DIM,), jnp.float32),
        "bn_mean": jnp.zeros((CLS_DIM,), jnp.float32),
        "bn_var": jnp.ones((CLS_DIM,), jnp.float32),
        "wc2": unif((1, CLS_DIM), k_c2),          "bc2": unif((1,), k_c2),
    }


def _reference_forward(x, params):
    """Pure-JAX f32 reference mirroring the PyTorch module in eval mode."""
    B, T, _ = x.shape
    H = HIDDEN_DIM
    h_in = x
    for (w_ih, w_hh, b_ih, b_hh) in params["lstm"]:
        h = jnp.zeros((B, H), jnp.float32)
        c = jnp.zeros((B, H), jnp.float32)
        outs = []
        for t in range(T):
            g = h_in[:, t, :] @ w_ih.T + h @ w_hh.T + b_ih + b_hh
            i = jax.nn.sigmoid(g[:, 0:H])
            f = jax.nn.sigmoid(g[:, H:2 * H])
            gg = jnp.tanh(g[:, 2 * H:3 * H])
            o = jax.nn.sigmoid(g[:, 3 * H:4 * H])
            c = f * c + i * gg
            h = o * jnp.tanh(c)
            outs.append(h)
        h_in = jnp.stack(outs, axis=1)
    lstm_out = h_in                                                     # (B, T, H)
    att = jnp.tanh(lstm_out @ params["wa1"].T + params["ba1"]) @ params["wa2"].T + params["ba2"]
    w = jax.nn.softmax(att, axis=1)
    context = jnp.sum(w * lstm_out, axis=1)                             # (B, H)
    h1 = context @ params["wc1"].T + params["bc1"]
    h1 = ((h1 - params["bn_mean"]) / jnp.sqrt(params["bn_var"] + BN_EPS)
          * params["bn_gamma"] + params["bn_beta"])
    h1 = jnp.maximum(h1, 0.0)
    logits = h1 @ params["wc2"].T + params["bc2"]
    return jax.nn.sigmoid(logits)


if __name__ == "__main__":
    key = jax.random.PRNGKey(0)
    k_x, k_p = jax.random.split(key)
    B, T = 2, 8
    x = jax.random.normal(k_x, (B, T, INPUT_DIM), jnp.float32)
    params = init_params(k_p)
    wslab, fslab = prepare_params(params)      # one-time prep, outside jit

    out = fall_detection_forward(x, wslab, fslab)
    out = jax.block_until_ready(out)

    assert out.shape == (B, 1), out.shape
    assert bool(jnp.all(jnp.isfinite(out)))
    assert bool(jnp.all((out >= 0.0) & (out <= 1.0)))

    # Loose-tolerance check vs the pure-JAX f32 reference (kernel uses bf16 MXU operands).
    ref = _reference_forward(x, params)
    max_err = float(jnp.max(jnp.abs(out - ref)))
    assert max_err < 3e-2, f"kernel/reference mismatch: max abs err {max_err}"

    print("KERNEL_OK")
</pallas_src>

<mosaic_0001>
module attributes {stable_mosaic.version = 11 : i64} {
  func.func @_fall_lstm_kernel(%arg0: i32, %arg1: memref<1x16x32xf32, #tpu.memory_space<vmem>>, %arg2: memref<160x256xbf16, #tpu.memory_space<vmem>>, %arg3: memref<8x128xf32, #tpu.memory_space<vmem>>, %arg4: memref<2x1xf32, #tpu.memory_space<vmem>>, %arg5: memref<16x128xf32, #tpu.memory_space<vmem>>, %arg6: memref<16x32xf32, #tpu.memory_space<vmem>>) attributes {dimension_semantics = [#tpu.dimension_semantics<parallel>], iteration_bounds = array<i64: 1>, scalar_prefetch = 0 : i64, scratch_operands = 2 : i64, tpu.core_type = #tpu.core_type<tc>, window_params = [{transform_indices = @transform_0, window_bounds = array<i64: 1, 16, 32>}, {pipeline_mode = #tpu.pipeline_mode<synchronous>, transform_indices = @transform_1, window_bounds = array<i64: 160, 256>}, {pipeline_mode = #tpu.pipeline_mode<synchronous>, transform_indices = @transform_2, window_bounds = array<i64: 8, 128>}, {transform_indices = @transform_3, window_bounds = array<i64: 2, 1>}]} {
    %c0 = arith.constant 0 : index
    %c0_0 = arith.constant 0 : index
    %0 = vector.load %arg2[%c0, %c0_0] : memref<160x256xbf16, #tpu.memory_space<vmem>>, vector<32x128xbf16>
    %c32 = arith.constant 32 : index
    %c0_1 = arith.constant 0 : index
    %1 = vector.load %arg2[%c32, %c0_1] : memref<160x256xbf16, #tpu.memory_space<vmem>>, vector<64x256xbf16>
    %c96 = arith.constant 96 : index
    %c0_2 = arith.constant 0 : index
    %2 = vector.load %arg2[%c96, %c0_2] : memref<160x256xbf16, #tpu.memory_space<vmem>>, vector<32x128xbf16>
    %c128 = arith.constant 128 : index
    %c0_3 = arith.constant 0 : index
    %3 = vector.load %arg2[%c128, %c0_3] : memref<160x256xbf16, #tpu.memory_space<vmem>>, vector<32x128xbf16>
    %c0_4 = arith.constant 0 : index
    %c0_5 = arith.constant 0 : index
    %4 = vector.load %arg3[%c0_4, %c0_5] : memref<8x128xf32, #tpu.memory_space<vmem>>, vector<8x128xf32>
    %5 = vector.extract_strided_slice %4 {offsets = [0, 0], sizes = [1, 128], strides = [1, 1]} : vector<8x128xf32> to vector<1x128xf32>
    %6 = vector.extract_strided_slice %4 {offsets = [1, 0], sizes = [1, 128], strides = [1, 1]} : vector<8x128xf32> to vector<1x128xf32>
    %7 = vector.extract_strided_slice %4 {offsets = [2, 0], sizes = [1, 128], strides = [1, 1]} : vector<8x128xf32> to vector<1x128xf32>
    %8 = vector.extract_strided_slice %4 {offsets = [3, 0], sizes = [1, 128], strides = [1, 1]} : vector<8x128xf32> to vector<1x128xf32>
    %9 = vector.extract_strided_slice %4 {offsets = [4, 0], sizes = [1, 128], strides = [1, 1]} : vector<8x128xf32> to vector<1x128xf32>
    %10 = vector.extract_strided_slice %4 {offsets = [5, 0], sizes = [1, 128], strides = [1, 1]} : vector<8x128xf32> to vector<1x128xf32>
    %11 = vector.extract_strided_slice %4 {offsets = [6, 0], sizes = [1, 1], strides = [1, 1]} : vector<8x128xf32> to vector<1x1xf32>
    %12 = vector.shape_cast %6 : vector<1x128xf32> to vector<1x128xf32>
    %13 = vector.broadcast %12 : vector<1x128xf32> to vector<2x128xf32>
    %c0_6 = arith.constant 0 : index
    %c0_7 = arith.constant 0 : index
    %c0_8 = arith.constant 0 : index
    %14 = vector.load %arg1[%c0_6, %c0_7, %c0_8] : memref<1x16x32xf32, #tpu.memory_space<vmem>>, vector<1x16x32xf32>
    %15 = vector.shape_cast %14 : vector<1x16x32xf32> to vector<16x32xf32>
    %16 = arith.truncf %15 : vector<16x32xf32> to vector<16x32xbf16>
    %cst = arith.constant dense<0.000000e+00> : vector<16x128xf32>
    %17 = tpu.matmul %16, %0, %cst {dimension_numbers = #tpu.dot_dimension_numbers<[1], [0], [0], [1], [0, 0, 1, 1], [], []>} : vector<16x32xbf16>, vector<32x128xbf16>, vector<16x128xf32> -> vector<16x128xf32>
    %18 = vector.broadcast %5 : vector<1x128xf32> to vector<16x128xf32>
    %19 = arith.addf %17, %18 : vector<16x128xf32>
    %c0_9 = arith.constant 0 : index
    %c0_10 = arith.constant 0 : index
    %20 = vector.load %arg5[%c0_9, %c0_10] : memref<16x128xf32, #tpu.memory_space<vmem>>, vector<16x128xf32>
    tpu.vector_store %arg5[%c0_9, %c0_10], %19 {strides = array<i32>} : memref<16x128xf32, #tpu.memory_space<vmem>>, vector<16x128xf32>,
    %cst_11 = arith.constant 0.000000e+00 : f32
    %21 = vector.broadcast %cst_11 : f32 to vector<2x32xf32>
    %c0_12 = arith.constant 0 : index
    %c0_13 = arith.constant 0 : index
    %22 = vector.load %arg5[%c0_12, %c0_13] : memref<16x128xf32, #tpu.memory_space<vmem>>, vector<2x128xf32>
    %23 = arith.negf %22 : vector<2x128xf32>
    %24 = math.exp %23 : vector<2x128xf32>
    %cst_14 = arith.constant 1.000000e+00 : f32
    %25 = vector.broadcast %cst_14 : f32 to vector<2x128xf32>
    %26 = arith.addf %25, %24 : vector<2x128xf32>
    %27 = arith.divf %25, %26 : vector<2x128xf32>
    %28 = math.tanh %22 : vector<2x128xf32>
    %29 = vector.extract_strided_slice %27 {offsets = [0, 0], sizes = [2, 32], strides = [1, 1]} : vector<2x128xf32> to vector<2x32xf32>
    %30 = vector.extract_strided_slice %27 {offsets = [0, 32], sizes = [2, 32], strides = [1, 1]} : vector<2x128xf32> to vector<2x32xf32>
    %31 = vector.extract_strided_slice %27 {offsets = [0, 96], sizes = [2, 32], strides = [1, 1]} : vector<2x128xf32> to vector<2x32xf32>
    %32 = vector.extract_strided_slice %28 {offsets = [0, 64], sizes = [2, 32], strides = [1, 1]} : vector<2x128xf32> to vector<2x32xf32>
    %33 = arith.mulf %30, %21 : vector<2x32xf32>
    %34 = arith.mulf %29, %32 : vector<2x32xf32>
    %35 = arith.addf %33, %34 : vector<2x32xf32>
    %36 = math.tanh %35 : vector<2x32xf32>
    %37 = arith.mulf %31, %36 : vector<2x32xf32>
    %38 = tpu.concatenate %37, %21 in 1 : vector<2x32xf32>, vector<2x32xf32> -> vector<2x64xf32>
    %39 = arith.truncf %38 : vector<2x64xf32> to vector<2x64xbf16>
    %cst_15 = arith.constant dense<0.000000e+00> : vector<2x256xf32>
    %40 = tpu.matmul %39, %1, %cst_15 {dimension_numbers = #tpu.dot_dimension_numbers<[1], [0], [0], [1], [0, 0, 1, 1], [], []>} : vector<2x64xbf16>, vector<64x256xbf16>, vector<2x256xf32> -> vector<2x256xf32>
    %c2 = arith.constant 2 : index
    %c0_16 = arith.constant 0 : index
    %41 = vector.load %arg5[%c2, %c0_16] : memref<16x128xf32, #tpu.memory_space<vmem>>, vector<2x128xf32>
    %42 = vector.extract_strided_slice %40 {offsets = [0, 0], sizes = [2, 128], strides = [1, 1]} : vector<2x256xf32> to vector<2x128xf32>
    %43 = arith.addf %41, %42 : vector<2x128xf32>
    %44 = vector.extract_strided_slice %40 {offsets = [0, 128], sizes = [2, 128], strides = [1, 1]} : vector<2x256xf32> to vector<2x128xf32>
    %45 = arith.addf %44, %13 : vector<2x128xf32>
    %46 = arith.negf %45 : vector<2x128xf32>
    %47 = math.exp %46 : vector<2x128xf32>
    %cst_17 = arith.constant 1.000000e+00 : f32
    %48 = vector.broadcast %cst_17 : f32 to vector<2x128xf32>
    %49 = arith.addf %48, %47 : vector<2x128xf32>
    %50 = arith.divf %48, %49 : vector<2x128xf32>
    %51 = math.tanh %45 : vector<2x128xf32>
    %52 = vector.extract_strided_slice %50 {offsets = [0, 0], sizes = [2, 32], strides = [1, 1]} : vector<2x128xf32> to vector<2x32xf32>
    %53 = vector.extract_strided_slice %50 {offsets = [0, 32], sizes = [2, 32], strides = [1, 1]} : vector<2x128xf32> to vector<2x32xf32>
    %54 = vector.extract_strided_slice %50 {offsets = [0, 96], sizes = [2, 32], strides = [1, 1]} : vector<2x128xf32> to vector<2x32xf32>
    %55 = vector.extract_strided_slice %51 {offsets = [0, 64], sizes = [2, 32], strides = [1, 1]} : vector<2x128xf32> to vector<2x32xf32>
    %56 = arith.mulf %53, %21 : vector<2x32xf32>
    %57 = arith.mulf %52, %55 : vector<2x32xf32>
    %58 = arith.addf %56, %57 : vector<2x32xf32>
    %59 = math.tanh %58 : vector<2x32xf32>
    %60 = arith.mulf %54, %59 : vector<2x32xf32>
    %61 = arith.negf %43 : vector<2x128xf32>
    %62 = math.exp %61 : vector<2x128xf32>
    %cst_18 = arith.constant 1.000000e+00 : f32
    %63 = vector.broadcast %cst_18 : f32 to vector<2x128xf32>
    %64 = arith.addf %63, %62 : vector<2x128xf32>
    %65 = arith.divf %63, %64 : vector<2x128xf32>
    %66 = math.tanh %43 : vector<2x128xf32>
    %67 = vector.extract_strided_slice %65 {offsets = [0, 0], sizes = [2, 32], strides = [1, 1]} : vector<2x128xf32> to vector<2x32xf32>
    %68 = vector.extract_strided_slice %65 {offsets = [0, 32], sizes = [2, 32], strides = [1, 1]} : vector<2x128xf32> to vector<2x32xf32>
    %69 = vector.extract_strided_slice %65 {offsets = [0, 96], sizes = [2, 32], strides = [1, 1]} : vector<2x128xf32> to vector<2x32xf32>
    %70 = vector.extract_strided_slice %66 {offsets = [0, 64], sizes = [2, 32], strides = [1, 1]} : vector<2x128xf32> to vector<2x32xf32>
    %71 = arith.mulf %68, %35 : vector<2x32xf32>
    %72 = arith.mulf %67, %70 : vector<2x32xf32>
    %73 = arith.addf %71, %72 : vector<2x32xf32>
    %74 = math.tanh %73 : vector<2x32xf32>
    %75 = arith.mulf %69, %74 : vector<2x32xf32>
    %c0_19 = arith.constant 0 : index
    %c0_20 = arith.constant 0 : index
    %76 = vector.load %arg6[%c0_19, %c0_20] : memref<16x32xf32, #tpu.memory_space<vmem>>, vector<2x32xf32>
    tpu.vector_store %arg6[%c0_19, %c0_20], %60 {strides = array<i32>} : memref<16x32xf32, #tpu.memory_space<vmem>>, vector<2x32xf32>,
    %77 = tpu.concatenate %75, %60 in 1 : vector<2x32xf32>, vector<2x32xf32> -> vector<2x64xf32>
    %78 = arith.truncf %77 : vector<2x64xf32> to vector<2x64xbf16>
    %cst_21 = arith.constant dense<0.000000e+00> : vector<2x256xf32>
    %79 = tpu.matmul %78, %1, %cst_21 {dimension_numbers = #tpu.dot_dimension_numbers<[1], [0], [0], [1], [0, 0, 1, 1], [], []>} : vector<2x64xbf16>, vector<64x256xbf16>, vector<2x256xf32> -> vector<2x256xf32>
    %c4 = arith.constant 4 : index
    %c0_22 = arith.constant 0 : index
    %80 = vector.load %arg5[%c4, %c0_22] : memref<16x128xf32, #tpu.memory_space<vmem>>, vector<2x128xf32>
    %81 = vector.extract_strided_slice %79 {offsets = [0, 0], sizes = [2, 128], strides = [1, 1]} : vector<2x256xf32> to vector<2x128xf32>
    %82 = arith.addf %80, %81 : vector<2x128xf32>
    %83 = vector.extract_strided_slice %79 {offsets = [0, 128], sizes = [2, 128], strides = [1, 1]} : vector<2x256xf32> to vector<2x128xf32>
    %84 = arith.addf %83, %13 : vector<2x128xf32>
    %85 = arith.negf %84 : vector<2x128xf32>
    %86 = math.exp %85 : vector<2x128xf32>
    %cst_23 = arith.constant 1.000000e+00 : f32
    %87 = vector.broadcast %cst_23 : f32 to vector<2x128xf32>
    %88 = arith.addf %87, %86 : vector<2x128xf32>
    %89 = arith.divf %87, %88 : vector<2x128xf32>
    %90 = math.tanh %84 : vector<2x128xf32>
    %91 = vector.extract_strided_slice %89 {offsets = [0, 0], sizes = [2, 32], strides = [1, 1]} : vector<2x128xf32> to vector<2x32xf32>
    %92 = vector.extract_strided_slice %89 {offsets = [0, 32], sizes = [2, 32], strides = [1, 1]} : vector<2x128xf32> to vector<2x32xf32>
    %93 = vector.extract_strided_slice %89 {offsets = [0, 96], sizes = [2, 32], strides = [1, 1]} : vector<2x128xf32> to vector<2x32xf32>
    %94 = vector.extract_strided_slice %90 {offsets = [0, 64], sizes = [2, 32], strides = [1, 1]} : vector<2x128xf32> to vector<2x32xf32>
    %95 = arith.mulf %92, %58 : vector<2x32xf32>
    %96 = arith.mulf %91, %94 : vector<2x32xf32>
    %97 = arith.addf %95, %96 : vector<2x32xf32>
    %98 = math.tanh %97 : vector<2x32xf32>
    %99 = arith.mulf %93, %98 : vector<2x32xf32>
    %100 = arith.negf %82 : vector<2x128xf32>
    %101 = math.exp %100 : vector<2x128xf32>
    %cst_24 = arith.constant 1.000000e+00 : f32
    %102 = vector.broadcast %cst_24 : f32 to vector<2x128xf32>
    %103 = arith.addf %102, %101 : vector<2x128xf32>
    %104 = arith.divf %102, %103 : vector<2x128xf32>
    %105 = math.tanh %82 : vector<2x128xf32>
    %106 = vector.extract_strided_slice %104 {offsets = [0, 0], sizes = [2, 32], strides = [1, 1]} : vector<2x128xf32> to vector<2x32xf32>
    %107 = vector.extract_strided_slice %104 {offsets = [0, 32], sizes = [2, 32], strides = [1, 1]} : vector<2x128xf32> to vector<2x32xf32>
    %108 = vector.extract_strided_slice %104 {offsets = [0, 96], sizes = [2, 32], strides = [1, 1]} : vector<2x128xf32> to vector<2x32xf32>
    %109 = vector.extract_strided_slice %105 {offsets = [0, 64], sizes = [2, 32], strides = [1, 1]} : vector<2x128xf32> to vector<2x32xf32>
    %110 = arith.mulf %107, %73 : vector<2x32xf32>
    %111 = arith.mulf %106, %109 : vector<2x32xf32>
    %112 = arith.addf %110, %111 : vector<2x32xf32>
    %113 = math.tanh %112 : vector<2x32xf32>
    %114 = arith.mulf %108, %113 : vector<2x32xf32>
    %c2_25 = arith.constant 2 : index
    %c0_26 = arith.constant 0 : index
    %115 = vector.load %arg6[%c2_25, %c0_26] : memref<16x32xf32, #tpu.memory_space<vmem>>, vector<2x32xf32>
    tpu.vector_store %arg6[%c2_25, %c0_26], %99 {strides = array<i32>} : memref<16x32xf32, #tpu.memory_space<vmem>>, vector<2x32xf32>,
    %116 = tpu.concatenate %114, %99 in 1 : vector<2x32xf32>, vector<2x32xf32> -> vector<2x64xf32>
    %117 = arith.truncf %116 : vector<2x64xf32> to vector<2x64xbf16>
    %cst_27 = arith.constant dense<0.000000e+00> : vector<2x256xf32>
    %118 = tpu.matmul %117, %1, %cst_27 {dimension_numbers = #tpu.dot_dimension_numbers<[1], [0], [0], [1], [0, 0, 1, 1], [], []>} : vector<2x64xbf16>, vector<64x256xbf16>, vector<2x256xf32> -> vector<2x256xf32>
    %c6 = arith.constant 6 : index
    %c0_28 = arith.constant 0 : index
    %119 = vector.load %arg5[%c6, %c0_28] : memref<16x128xf32, #tpu.memory_space<vmem>>, vector<2x128xf32>
    %120 = vector.extract_strided_slice %118 {offsets = [0, 0], sizes = [2, 128], strides = [1, 1]} : vector<2x256xf32> to vector<2x128xf32>
    %121 = arith.addf %119, %120 : vector<2x128xf32>
    %122 = vector.extract_strided_slice %118 {offsets = [0, 128], sizes = [2, 128], strides = [1, 1]} : vector<2x256xf32> to vector<2x128xf32>
    %123 = arith.addf %122, %13 : vector<2x128xf32>
    %124 = arith.negf %123 : vector<2x128xf32>
    %125 = math.exp %124 : vector<2x128xf32>
    %cst_29 = arith.constant 1.000000e+00 : f32
    %126 = vector.broadcast %cst_29 : f32 to vector<2x128xf32>
    %127 = arith.addf %126, %125 : vector<2x128xf32>
    %128 = arith.divf %126, %127 : vector<2x128xf32>
    %129 = math.tanh %123 : vector<2x128xf32>
    %130 = vector.extract_strided_slice %128 {offsets = [0, 0], sizes = [2, 32], strides = [1, 1]} : vector<2x128xf32> to vector<2x32xf32>
    %131 = vector.extract_strided_slice %128 {offsets = [0, 32], sizes = [2, 32], strides = [1, 1]} : vector<2x128xf32> to vector<2x32xf32>
    %132 = vector.extract_strided_slice %128 {offsets = [0, 96], sizes = [2, 32], strides = [1, 1]} : vector<2x128xf32> to vector<2x32xf32>
    %133 = vector.extract_strided_slice %129 {offsets = [0, 64], sizes = [2, 32], strides = [1, 1]} : vector<2x128xf32> to vector<2x32xf32>
    %134 = arith.mulf %131, %97 : vector<2x32xf32>
    %135 = arith.mulf %130, %133 : vector<2x32xf32>
    %136 = arith.addf %134, %135 : vector<2x32xf32>
    %137 = math.tanh %136 : vector<2x32xf32>
    %138 = arith.mulf %132, %137 : vector<2x32xf32>
    %139 = arith.negf %121 : vector<2x128xf32>
    %140 = math.exp %139 : vector<2x128xf32>
    %cst_30 = arith.constant 1.000000e+00 : f32
    %141 = vector.broadcast %cst_30 : f32 to vector<2x128xf32>
    %142 = arith.addf %141, %140 : vector<2x128xf32>
    %143 = arith.divf %141, %142 : vector<2x128xf32>
    %144 = math.tanh %121 : vector<2x128xf32>
    %145 = vector.extract_strided_slice %143 {offsets = [0, 0], sizes = [2, 32], strides = [1, 1]} : vector<2x128xf32> to vector<2x32xf32>
    %146 = vector.extract_strided_slice %143 {offsets = [0, 32], sizes = [2, 32], strides = [1, 1]} : vector<2x128xf32> to vector<2x32xf32>
    %147 = vector.extract_strided_slice %143 {offsets = [0, 96], sizes = [2, 32], strides = [1, 1]} : vector<2x128xf32> to vector<2x32xf32>
    %148 = vector.extract_strided_slice %144 {offsets = [0, 64], sizes = [2, 32], strides = [1, 1]} : vector<2x128xf32> to vector<2x32xf32>
    %149 = arith.mulf %146, %112 : vector<2x32xf32>
    %150 = arith.mulf %145, %148 : vector<2x32xf32>
    %151 = arith.addf %149, %150 : vector<2x32xf32>
    %152 = math.tanh %151 : vector<2x32xf32>
    %153 = arith.mulf %147, %152 : vector<2x32xf32>
    %c4_31 = arith.constant 4 : index
    %c0_32 = arith.constant 0 : index
    %154 = vector.load %arg6[%c4_31, %c0_32] : memref<16x32xf32, #tpu.memory_space<vmem>>, vector<2x32xf32>
    tpu.vector_store %arg6[%c4_31, %c0_32], %138 {strides = array<i32>} : memref<16x32xf32, #tpu.memory_space<vmem>>, vector<2x32xf32>,
    %155 = tpu.concatenate %153, %138 in 1 : vector<2x32xf32>, vector<2x32xf32> -> vector<2x64xf32>
    %156 = arith.truncf %155 : vector<2x64xf32> to vector<2x64xbf16>
    %cst_33 = arith.constant dense<0.000000e+00> : vector<2x256xf32>
    %157 = tpu.matmul %156, %1, %cst_33 {dimension_numbers = #tpu.dot_dimension_numbers<[1], [0], [0], [1], [0, 0, 1, 1], [], []>} : vector<2x64xbf16>, vector<64x256xbf16>, vector<2x256xf32> -> vector<2x256xf32>
    %c8 = arith.constant 8 : index
    %c0_34 = arith.constant 0 : index
    %158 = vector.load %arg5[%c8, %c0_34] : memref<16x128xf32, #tpu.memory_space<vmem>>, vector<2x128xf32>
    %159 = vector.extract_strided_slice %157 {offsets = [0, 0], sizes = [2, 128], strides = [1, 1]} : vector<2x256xf32> to vector<2x128xf32>
    %160 = arith.addf %158, %159 : vector<2x128xf32>
    %161 = vector.extract_strided_slice %157 {offsets = [0, 128], sizes = [2, 128], strides = [1, 1]} : vector<2x256xf32> to vector<2x128xf32>
    %162 = arith.addf %161, %13 : vector<2x128xf32>
    %163 = arith.negf %162 : vector<2x128xf32>
    %164 = math.exp %163 : vector<2x128xf32>
    %cst_35 = arith.constant 1.000000e+00 : f32
    %165 = vector.broadcast %cst_35 : f32 to vector<2x128xf32>
    %166 = arith.addf %165, %164 : vector<2x128xf32>
    %167 = arith.divf %165, %166 : vector<2x128xf32>
    %168 = math.tanh %162 : vector<2x128xf32>
    %169 = vector.extract_strided_slice %167 {offsets = [0, 0], sizes = [2, 32], strides = [1, 1]} : vector<2x128xf32> to vector<2x32xf32>
    %170 = vector.extract_strided_slice %167 {offsets = [0, 32], sizes = [2, 32], strides = [1, 1]} : vector<2x128xf32> to vector<2x32xf32>
    %171 = vector.extract_strided_slice %167 {offsets = [0, 96], sizes = [2, 32], strides = [1, 1]} : vector<2x128xf32> to vector<2x32xf32>
    %172 = vector.extract_strided_slice %168 {offsets = [0, 64], sizes = [2, 32], strides = [1, 1]} : vector<2x128xf32> to vector<2x32xf32>
    %173 = arith.mulf %170, %136 : vector<2x32xf32>
    %174 = arith.mulf %169, %172 : vector<2x32xf32>
    %175 = arith.addf %173, %174 : vector<2x32xf32>
    %176 = math.tanh %175 : vector<2x32xf32>
    %177 = arith.mulf %171, %176 : vector<2x32xf32>
    %178 = arith.negf %160 : vector<2x128xf32>
    %179 = math.exp %178 : vector<2x128xf32>
    %cst_36 = arith.constant 1.000000e+00 : f32
    %180 = vector.broadcast %cst_36 : f32 to vector<2x128xf32>
    %181 = arith.addf %180, %179 : vector<2x128xf32>
    %182 = arith.divf %180, %181 : vector<2x128xf32>
    %183 = math.tanh %160 : vector<2x128xf32>
    %184 = vector.extract_strided_slice %182 {offsets = [0, 0], sizes = [2, 32], strides = [1, 1]} : vector<2x128xf32> to vector<2x32xf32>
    %185 = vector.extract_strided_slice %182 {offsets = [0, 32], sizes = [2, 32], strides = [1, 1]} : vector<2x128xf32> to vector<2x32xf32>
    %186 = vector.extract_strided_slice %182 {offsets = [0, 96], sizes = [2, 32], strides = [1, 1]} : vector<2x128xf32> to vector<2x32xf32>
    %187 = vector.extract_strided_slice %183 {offsets = [0, 64], sizes = [2, 32], strides = [1, 1]} : vector<2x128xf32> to vector<2x32xf32>
    %188 = arith.mulf %185, %151 : vector<2x32xf32>
    %189 = arith.mulf %184, %187 : vector<2x32xf32>
    %190 = arith.addf %188, %189 : vector<2x32xf32>
    %191 = math.tanh %190 : vector<2x32xf32>
    %192 = arith.mulf %186, %191 : vector<2x32xf32>
    %c6_37 = arith.constant 6 : index
    %c0_38 = arith.constant 0 : index
    %193 = vector.load %arg6[%c6_37, %c0_38] : memref<16x32xf32, #tpu.memory_space<vmem>>, vector<2x32xf32>
    tpu.vector_store %arg6[%c6_37, %c0_38], %177 {strides = array<i32>} : memref<16x32xf32, #tpu.memory_space<vmem>>, vector<2x32xf32>,
    %194 = tpu.concatenate %192, %177 in 1 : vector<2x32xf32>, vector<2x32xf32> -> vector<2x64xf32>
    %195 = arith.truncf %194 : vector<2x64xf32> to vector<2x64xbf16>
    %cst_39 = arith.constant dense<0.000000e+00> : vector<2x256xf32>
    %196 = tpu.matmul %195, %1, %cst_39 {dimension_numbers = #tpu.dot_dimension_numbers<[1], [0], [0], [1], [0, 0, 1, 1], [], []>} : vector<2x64xbf16>, vector<64x256xbf16>, vector<2x256xf32> -> vector<2x256xf32>
    %c10 = arith.constant 10 : index
    %c0_40 = arith.constant 0 : index
    %197 = vector.load %arg5[%c10, %c0_40] : memref<16x128xf32, #tpu.memory_space<vmem>>, vector<2x128xf32>
    %198 = vector.extract_strided_slice %196 {offsets = [0, 0], sizes = [2, 128], strides = [1, 1]} : vector<2x256xf32> to vector<2x128xf32>
    %199 = arith.addf %197, %198 : vector<2x128xf32>
    %200 = vector.extract_strided_slice %196 {offsets = [0, 128], sizes = [2, 128], strides = [1, 1]} : vector<2x256xf32> to vector<2x128xf32>
    %201 = arith.addf %200, %13 : vector<2x128xf32>
    %202 = arith.negf %201 : vector<2x128xf32>
    %203 = math.exp %202 : vector<2x128xf32>
    %cst_41 = arith.constant 1.000000e+00 : f32
    %204 = vector.broadcast %cst_41 : f32 to vector<2x128xf32>
    %205 = arith.addf %204, %203 : vector<2x128xf32>
    %206 = arith.divf %204, %205 : vector<2x128xf32>
    %207 = math.tanh %201 : vector<2x128xf32>
    %208 = vector.extract_strided_slice %206 {offsets = [0, 0], sizes = [2, 32], strides = [1, 1]} : vector<2x128xf32> to vector<2x32xf32>
    %209 = vector.extract_strided_slice %206 {offsets = [0, 32], sizes = [2, 32], strides = [1, 1]} : vector<2x128xf32> to vector<2x32xf32>
    %210 = vector.extract_strided_slice %206 {offsets = [0, 96], sizes = [2, 32], strides = [1, 1]} : vector<2x128xf32> to vector<2x32xf32>
    %211 = vector.extract_strided_slice %207 {offsets = [0, 64], sizes = [2, 32], strides = [1, 1]} : vector<2x128xf32> to vector<2x32xf32>
    %212 = arith.mulf %209, %175 : vector<2x32xf32>
    %213 = arith.mulf %208, %211 : vector<2x32xf32>
    %214 = arith.addf %212, %213 : vector<2x32xf32>
    %215 = math.tanh %214 : vector<2x32xf32>
    %216 = arith.mulf %210, %215 : vector<2x32xf32>
    %217 = arith.negf %199 : vector<2x128xf32>
    %218 = math.exp %217 : vector<2x128xf32>
    %cst_42 = arith.constant 1.000000e+00 : f32
    %219 = vector.broadcast %cst_42 : f32 to vector<2x128xf32>
    %220 = arith.addf %219, %218 : vector<2x128xf32>
    %221 = arith.divf %219, %220 : vector<2x128xf32>
    %222 = math.tanh %199 : vector<2x128xf32>
    %223 = vector.extract_strided_slice %221 {offsets = [0, 0], sizes = [2, 32], strides = [1, 1]} : vector<2x128xf32> to vector<2x32xf32>
    %224 = vector.extract_strided_slice %221 {offsets = [0, 32], sizes = [2, 32], strides = [1, 1]} : vector<2x128xf32> to vector<2x32xf32>
    %225 = vector.extract_strided_slice %221 {offsets = [0, 96], sizes = [2, 32], strides = [1, 1]} : vector<2x128xf32> to vector<2x32xf32>
    %226 = vector.extract_strided_slice %222 {offsets = [0, 64], sizes = [2, 32], strides = [1, 1]} : vector<2x128xf32> to vector<2x32xf32>
    %227 = arith.mulf %224, %190 : vector<2x32xf32>
    %228 = arith.mulf %223, %226 : vector<2x32xf32>
    %229 = arith.addf %227, %228 : vector<2x32xf32>
    %230 = math.tanh %229 : vector<2x32xf32>
    %231 = arith.mulf %225, %230 : vector<2x32xf32>
    %c8_43 = arith.constant 8 : index
    %c0_44 = arith.constant 0 : index
    %232 = vector.load %arg6[%c8_43, %c0_44] : memref<16x32xf32, #tpu.memory_space<vmem>>, vector<2x32xf32>
    tpu.vector_store %arg6[%c8_43, %c0_44], %216 {strides = array<i32>} : memref<16x32xf32, #tpu.memory_space<vmem>>, vector<2x32xf32>,
    %233 = tpu.concatenate %231, %216 in 1 : vector<2x32xf32>, vector<2x32xf32> -> vector<2x64xf32>
    %234 = arith.truncf %233 : vector<2x64xf32> to vector<2x64xbf16>
    %cst_45 = arith.constant dense<0.000000e+00> : vector<2x256xf32>
    %235 = tpu.matmul %234, %1, %cst_45 {dimension_numbers = #tpu.dot_dimension_numbers<[1], [0], [0], [1], [0, 0, 1, 1], [], []>} : vector<2x64xbf16>, vector<64x256xbf16>, vector<2x256xf32> -> vector<2x256xf32>
    %c12 = arith.constant 12 : index
    %c0_46 = arith.constant 0 : index
    %236 = vector.load %arg5[%c12, %c0_46] : memref<16x128xf32, #tpu.memory_space<vmem>>, vector<2x128xf32>
    %237 = vector.extract_strided_slice %235 {offsets = [0, 0], sizes = [2, 128], strides = [1, 1]} : vector<2x256xf32> to vector<2x128xf32>
    %238 = arith.addf %236, %237 : vector<2x128xf32>
    %239 = vector.extract_strided_slice %235 {offsets = [0, 128], sizes = [2, 128], strides = [1, 1]} : vector<2x256xf32> to vector<2x128xf32>
    %240 = arith.addf %239, %13 : vector<2x128xf32>
    %241 = arith.negf %240 : vector<2x128xf32>
    %242 = math.exp %241 : vector<2x128xf32>
    %cst_47 = arith.constant 1.000000e+00 : f32
    %243 = vector.broadcast %cst_47 : f32 to vector<2x128xf32>
    %244 = arith.addf %243, %242 : vector<2x128xf32>
    %245 = arith.divf %243, %244 : vector<2x128xf32>
    %246 = math.tanh %240 : vector<2x128xf32>
    %247 = vector.extract_strided_slice %245 {offsets = [0, 0], sizes = [2, 32], strides = [1, 1]} : vector<2x128xf32> to vector<2x32xf32>
    %248 = vector.extract_strided_slice %245 {offsets = [0, 32], sizes = [2, 32], strides = [1, 1]} : vector<2x128xf32> to vector<2x32xf32>
    %249 = vector.extract_strided_slice %245 {offsets = [0, 96], sizes = [2, 32], strides = [1, 1]} : vector<2x128xf32> to vector<2x32xf32>
    %250 = vector.extract_strided_slice %246 {offsets = [0, 64], sizes = [2, 32], strides = [1, 1]} : vector<2x128xf32> to vector<2x32xf32>
    %251 = arith.mulf %248, %214 : vector<2x32xf32>
    %252 = arith.mulf %247, %250 : vector<2x32xf32>
    %253 = arith.addf %251, %252 : vector<2x32xf32>
    %254 = math.tanh %253 : vector<2x32xf32>
    %255 = arith.mulf %249, %254 : vector<2x32xf32>
    %256 = arith.negf %238 : vector<2x128xf32>
    %257 = math.exp %256 : vector<2x128xf32>
    %cst_48 = arith.constant 1.000000e+00 : f32
    %258 = vector.broadcast %cst_48 : f32 to vector<2x128xf32>
    %259 = arith.addf %258, %257 : vector<2x128xf32>
    %260 = arith.divf %258, %259 : vector<2x128xf32>
    %261 = math.tanh %238 : vector<2x128xf32>
    %262 = vector.extract_strided_slice %260 {offsets = [0, 0], sizes = [2, 32], strides = [1, 1]} : vector<2x128xf32> to vector<2x32xf32>
    %263 = vector.extract_strided_slice %260 {offsets = [0, 32], sizes = [2, 32], strides = [1, 1]} : vector<2x128xf32> to vector<2x32xf32>
    %264 = vector.extract_strided_slice %260 {offsets = [0, 96], sizes = [2, 32], strides = [1, 1]} : vector<2x128xf32> to vector<2x32xf32>
    %265 = vector.extract_strided_slice %261 {offsets = [0, 64], sizes = [2, 32], strides = [1, 1]} : vector<2x128xf32> to vector<2x32xf32>
    %266 = arith.mulf %263, %229 : vector<2x32xf32>
    %267 = arith.mulf %262, %265 : vector<2x32xf32>
    %268 = arith.addf %266, %267 : vector<2x32xf32>
    %269 = math.tanh %268 : vector<2x32xf32>
    %270 = arith.mulf %264, %269 : vector<2x32xf32>
    %c10_49 = arith.constant 10 : index
    %c0_50 = arith.constant 0 : index
    %271 = vector.load %arg6[%c10_49, %c0_50] : memref<16x32xf32, #tpu.memory_space<vmem>>, vector<2x32xf32>
    tpu.vector_store %arg6[%c10_49, %c0_50], %255 {strides = array<i32>} : memref<16x32xf32, #tpu.memory_space<vmem>>, vector<2x32xf32>,
    %272 = tpu.concatenate %270, %255 in 1 : vector<2x32xf32>, vector<2x32xf32> -> vector<2x64xf32>
    %273 = arith.truncf %272 : vector<2x64xf32> to vector<2x64xbf16>
    %cst_51 = arith.constant dense<0.000000e+00> : vector<2x256xf32>
    %274 = tpu.matmul %273, %1, %cst_51 {dimension_numbers = #tpu.dot_dimension_numbers<[1], [0], [0], [1], [0, 0, 1, 1], [], []>} : vector<2x64xbf16>, vector<64x256xbf16>, vector<2x256xf32> -> vector<2x256xf32>
    %c14 = arith.constant 14 : index
    %c0_52 = arith.constant 0 : index
    %275 = vector.load %arg5[%c14, %c0_52] : memref<16x128xf32, #tpu.memory_space<vmem>>, vector<2x128xf32>
    %276 = vector.extract_strided_slice %274 {offsets = [0, 0], sizes = [2, 128], strides = [1, 1]} : vector<2x256xf32> to vector<2x128xf32>
    %277 = arith.addf %275, %276 : vector<2x128xf32>
    %278 = vector.extract_strided_slice %274 {offsets = [0, 128], sizes = [2, 128], strides = [1, 1]} : vector<2x256xf32> to vector<2x128xf32>
    %279 = arith.addf %278, %13 : vector<2x128xf32>
    %280 = arith.negf %279 : vector<2x128xf32>
    %281 = math.exp %280 : vector<2x128xf32>
    %cst_53 = arith.constant 1.000000e+00 : f32
    %282 = vector.broadcast %cst_53 : f32 to vector<2x128xf32>
    %283 = arith.addf %282, %281 : vector<2x128xf32>
    %284 = arith.divf %282, %283 : vector<2x128xf32>
    %285 = math.tanh %279 : vector<2x128xf32>
    %286 = vector.extract_strided_slice %284 {offsets = [0, 0], sizes = [2, 32], strides = [1, 1]} : vector<2x128xf32> to vector<2x32xf32>
    %287 = vector.extract_strided_slice %284 {offsets = [0, 32], sizes = [2, 32], strides = [1, 1]} : vector<2x128xf32> to vector<2x32xf32>
    %288 = vector.extract_strided_slice %284 {offsets = [0, 96], sizes = [2, 32], strides = [1, 1]} : vector<2x128xf32> to vector<2x32xf32>
    %289 = vector.extract_strided_slice %285 {offsets = [0, 64], sizes = [2, 32], strides = [1, 1]} : vector<2x128xf32> to vector<2x32xf32>
    %290 = arith.mulf %287, %253 : vector<2x32xf32>
    %291 = arith.mulf %286, %289 : vector<2x32xf32>
    %292 = arith.addf %290, %291 : vector<2x32xf32>
    %293 = math.tanh %292 : vector<2x32xf32>
    %294 = arith.mulf %288, %293 : vector<2x32xf32>
    %295 = arith.negf %277 : vector<2x128xf32>
    %296 = math.exp %295 : vector<2x128xf32>
    %cst_54 = arith.constant 1.000000e+00 : f32
    %297 = vector.broadcast %cst_54 : f32 to vector<2x128xf32>
    %298 = arith.addf %297, %296 : vector<2x128xf32>
    %299 = arith.divf %297, %298 : vector<2x128xf32>
    %300 = math.tanh %277 : vector<2x128xf32>
    %301 = vector.extract_strided_slice %299 {offsets = [0, 0], sizes = [2, 32], strides = [1, 1]} : vector<2x128xf32> to vector<2x32xf32>
    %302 = vector.extract_strided_slice %299 {offsets = [0, 32], sizes = [2, 32], strides = [1, 1]} : vector<2x128xf32> to vector<2x32xf32>
    %303 = vector.extract_strided_slice %299 {offsets = [0, 96], sizes = [2, 32], strides = [1, 1]} : vector<2x128xf32> to vector<2x32xf32>
    %304 = vector.extract_strided_slice %300 {offsets = [0, 64], sizes = [2, 32], strides = [1, 1]} : vector<2x128xf32> to vector<2x32xf32>
    %305 = arith.mulf %302, %268 : vector<2x32xf32>
    %306 = arith.mulf %301, %304 : vector<2x32xf32>
    %307 = arith.addf %305, %306 : vector<2x32xf32>
    %308 = math.tanh %307 : vector<2x32xf32>
    %309 = arith.mulf %303, %308 : vector<2x32xf32>
    %c12_55 = arith.constant 12 : index
    %c0_56 = arith.constant 0 : index
    %310 = vector.load %arg6[%c12_55, %c0_56] : memref<16x32xf32, #tpu.memory_space<vmem>>, vector<2x32xf32>
    tpu.vector_store %arg6[%c12_55, %c0_56], %294 {strides = array<i32>} : memref<16x32xf32, #tpu.memory_space<vmem>>, vector<2x32xf32>,
    %311 = tpu.concatenate %309, %294 in 1 : vector<2x32xf32>, vector<2x32xf32> -> vector<2x64xf32>
    %312 = arith.truncf %311 : vector<2x64xf32> to vector<2x64xbf16>
    %cst_57 = arith.constant dense<0.000000e+00> : vector<2x256xf32>
    %313 = tpu.matmul %312, %1, %cst_57 {dimension_numbers = #tpu.dot_dimension_numbers<[1], [0], [0], [1], [0, 0, 1, 1], [], []>} : vector<2x64xbf16>, vector<64x256xbf16>, vector<2x256xf32> -> vector<2x256xf32>
    %314 = vector.extract_strided_slice %313 {offsets = [0, 128], sizes = [2, 128], strides = [1, 1]} : vector<2x256xf32> to vector<2x128xf32>
    %315 = arith.addf %314, %13 : vector<2x128xf32>
    %316 = arith.negf %315 : vector<2x128xf32>
    %317 = math.exp %316 : vector<2x128xf32>
    %cst_58 = arith.constant 1.000000e+00 : f32
    %318 = vector.broadcast %cst_58 : f32 to vector<2x128xf32>
    %319 = arith.addf %318, %317 : vector<2x128xf32>
    %320 = arith.divf %318, %319 : vector<2x128xf32>
    %321 = math.tanh %315 : vector<2x128xf32>
    %322 = vector.extract_strided_slice %320 {offsets = [0, 0], sizes = [2, 32], strides = [1, 1]} : vector<2x128xf32> to vector<2x32xf32>
    %323 = vector.extract_strided_slice %320 {offsets = [0, 32], sizes = [2, 32], strides = [1, 1]} : vector<2x128xf32> to vector<2x32xf32>
    %324 = vector.extract_strided_slice %320 {offsets = [0, 96], sizes = [2, 32], strides = [1, 1]} : vector<2x128xf32> to vector<2x32xf32>
    %325 = vector.extract_strided_slice %321 {offsets = [0, 64], sizes = [2, 32], strides = [1, 1]} : vector<2x128xf32> to vector<2x32xf32>
    %326 = arith.mulf %323, %292 : vector<2x32xf32>
    %327 = arith.mulf %322, %325 : vector<2x32xf32>
    %328 = arith.addf %326, %327 : vector<2x32xf32>
    %329 = math.tanh %328 : vector<2x32xf32>
    %330 = arith.mulf %324, %329 : vector<2x32xf32>
    %c14_59 = arith.constant 14 : index
    %c0_60 = arith.constant 0 : index
    %331 = vector.load %arg6[%c14_59, %c0_60] : memref<16x32xf32, #tpu.memory_space<vmem>>, vector<2x32xf32>
    tpu.vector_store %arg6[%c14_59, %c0_60], %330 {strides = array<i32>} : memref<16x32xf32, #tpu.memory_space<vmem>>, vector<2x32xf32>,
    %c0_61 = arith.constant 0 : index
    %c0_62 = arith.constant 0 : index
    %332 = vector.load %arg6[%c0_61, %c0_62] : memref<16x32xf32, #tpu.memory_space<vmem>>, vector<16x32xf32>
    %333 = arith.truncf %332 : vector<16x32xf32> to vector<16x32xbf16>
    %cst_63 = arith.constant dense<0.000000e+00> : vector<16x128xf32>
    %334 = tpu.matmul %333, %2, %cst_63 {dimension_numbers = #tpu.dot_dimension_numbers<[1], [0], [0], [1], [0, 0, 1, 1], [], []>} : vector<16x32xbf16>, vector<32x128xbf16>, vector<16x128xf32> -> vector<16x128xf32>
    %335 = vector.broadcast %7 : vector<1x128xf32> to vector<16x128xf32>
    %336 = arith.addf %334, %335 : vector<16x128xf32>
    %337 = math.tanh %336 : vector<16x128xf32>
    %338 = vector.broadcast %8 : vector<1x128xf32> to vector<16x128xf32>
    %339 = arith.mulf %337, %338 : vector<16x128xf32>
    %cst_64 = arith.constant dense<0.000000e+00> : vector<16xf32>
    %340 = vector.multi_reduction <add>, %339, %cst_64 [1] : vector<16x128xf32> to vector<16xf32>
    %341 = vector.shape_cast %340 : vector<16xf32> to vector<16x1xf32>
    %342 = vector.extract_strided_slice %341 {offsets = [0, 0], sizes = [2, 1], strides = [1, 1]} : vector<16x1xf32> to vector<2x1xf32>
    %343 = vector.extract_strided_slice %341 {offsets = [2, 0], sizes = [2, 1], strides = [1, 1]} : vector<16x1xf32> to vector<2x1xf32>
    %344 = arith.maximumf %342, %343 : vector<2x1xf32>
    %345 = vector.extract_strided_slice %341 {offsets = [4, 0], sizes = [2, 1], strides = [1, 1]} : vector<16x1xf32> to vector<2x1xf32>
    %346 = arith.maximumf %344, %345 : vector<2x1xf32>
    %347 = vector.extract_strided_slice %341 {offsets = [6, 0], sizes = [2, 1], strides = [1, 1]} : vector<16x1xf32> to vector<2x1xf32>
    %348 = arith.maximumf %346, %347 : vector<2x1xf32>
    %349 = vector.extract_strided_slice %341 {offsets = [8, 0], sizes = [2, 1], strides = [1, 1]} : vector<16x1xf32> to vector<2x1xf32>
    %350 = arith.maximumf %348, %349 : vector<2x1xf32>
    %351 = vector.extract_strided_slice %341 {offsets = [10, 0], sizes = [2, 1], strides = [1, 1]} : vector<16x1xf32> to vector<2x1xf32>
    %352 = arith.maximumf %350, %351 : vector<2x1xf32>
    %353 = vector.extract_strided_slice %341 {offsets = [12, 0], sizes = [2, 1], strides = [1, 1]} : vector<16x1xf32> to vector<2x1xf32>
    %354 = arith.maximumf %352, %353 : vector<2x1xf32>
    %355 = vector.extract_strided_slice %341 {offsets = [14, 0], sizes = [2, 1], strides = [1, 1]} : vector<16x1xf32> to vector<2x1xf32>
    %356 = arith.maximumf %354, %355 : vector<2x1xf32>
    %cst_65 = arith.constant 0.000000e+00 : f32
    %357 = vector.broadcast %cst_65 : f32 to vector<2x1xf32>
    %cst_66 = arith.constant 0.000000e+00 : f32
    %358 = vector.broadcast %cst_66 : f32 to vector<2x32xf32>
    %359 = vector.extract_strided_slice %341 {offsets = [0, 0], sizes = [2, 1], strides = [1, 1]} : vector<16x1xf32> to vector<2x1xf32>
    %360 = arith.subf %359, %356 : vector<2x1xf32>
    %361 = math.exp %360 : vector<2x1xf32>
    %362 = arith.addf %357, %361 : vector<2x1xf32>
    %363 = vector.extract_strided_slice %332 {offsets = [0, 0], sizes = [2, 32], strides = [1, 1]} : vector<16x32xf32> to vector<2x32xf32>
    %364 = vector.broadcast %361 : vector<2x1xf32> to vector<2x32xf32>
    %365 = arith.mulf %364, %363 : vector<2x32xf32>
    %366 = arith.addf %358, %365 : vector<2x32xf32>
    %367 = vector.extract_strided_slice %341 {offsets = [2, 0], sizes = [2, 1], strides = [1, 1]} : vector<16x1xf32> to vector<2x1xf32>
    %368 = arith.subf %367, %356 : vector<2x1xf32>
    %369 = math.exp %368 : vector<2x1xf32>
    %370 = arith.addf %362, %369 : vector<2x1xf32>
    %371 = vector.extract_strided_slice %332 {offsets = [2, 0], sizes = [2, 32], strides = [1, 1]} : vector<16x32xf32> to vector<2x32xf32>
    %372 = vector.broadcast %369 : vector<2x1xf32> to vector<2x32xf32>
    %373 = arith.mulf %372, %371 : vector<2x32xf32>
    %374 = arith.addf %366, %373 : vector<2x32xf32>
    %375 = vector.extract_strided_slice %341 {offsets = [4, 0], sizes = [2, 1], strides = [1, 1]} : vector<16x1xf32> to vector<2x1xf32>
    %376 = arith.subf %375, %356 : vector<2x1xf32>
    %377 = math.exp %376 : vector<2x1xf32>
    %378 = arith.addf %370, %377 : vector<2x1xf32>
    %379 = vector.extract_strided_slice %332 {offsets = [4, 0], sizes = [2, 32], strides = [1, 1]} : vector<16x32xf32> to vector<2x32xf32>
    %380 = vector.broadcast %377 : vector<2x1xf32> to vector<2x32xf32>
    %381 = arith.mulf %380, %379 : vector<2x32xf32>
    %382 = arith.addf %374, %381 : vector<2x32xf32>
    %383 = vector.extract_strided_slice %341 {offsets = [6, 0], sizes = [2, 1], strides = [1, 1]} : vector<16x1xf32> to vector<2x1xf32>
    %384 = arith.subf %383, %356 : vector<2x1xf32>
    %385 = math.exp %384 : vector<2x1xf32>
    %386 = arith.addf %378, %385 : vector<2x1xf32>
    %387 = vector.extract_strided_slice %332 {offsets = [6, 0], sizes = [2, 32], strides = [1, 1]} : vector<16x32xf32> to vector<2x32xf32>
    %388 = vector.broadcast %385 : vector<2x1xf32> to vector<2x32xf32>
    %389 = arith.mulf %388, %387 : vector<2x32xf32>
    %390 = arith.addf %382, %389 : vector<2x32xf32>
    %391 = vector.extract_strided_slice %341 {offsets = [8, 0], sizes = [2, 1], strides = [1, 1]} : vector<16x1xf32> to vector<2x1xf32>
    %392 = arith.subf %391, %356 : vector<2x1xf32>
    %393 = math.exp %392 : vector<2x1xf32>
    %394 = arith.addf %386, %393 : vector<2x1xf32>
    %395 = vector.extract_strided_slice %332 {offsets = [8, 0], sizes = [2, 32], strides = [1, 1]} : vector<16x32xf32> to vector<2x32xf32>
    %396 = vector.broadcast %393 : vector<2x1xf32> to vector<2x32xf32>
    %397 = arith.mulf %396, %395 : vector<2x32xf32>
    %398 = arith.addf %390, %397 : vector<2x32xf32>
    %399 = vector.extract_strided_slice %341 {offsets = [10, 0], sizes = [2, 1], strides = [1, 1]} : vector<16x1xf32> to vector<2x1xf32>
    %400 = arith.subf %399, %356 : vector<2x1xf32>
    %401 = math.exp %400 : vector<2x1xf32>
    %402 = arith.addf %394, %401 : vector<2x1xf32>
    %403 = vector.extract_strided_slice %332 {offsets = [10, 0], sizes = [2, 32], strides = [1, 1]} : vector<16x32xf32> to vector<2x32xf32>
    %404 = vector.broadcast %401 : vector<2x1xf32> to vector<2x32xf32>
    %405 = arith.mulf %404, %403 : vector<2x32xf32>
    %406 = arith.addf %398, %405 : vector<2x32xf32>
    %407 = vector.extract_strided_slice %341 {offsets = [12, 0], sizes = [2, 1], strides = [1, 1]} : vector<16x1xf32> to vector<2x1xf32>
    %408 = arith.subf %407, %356 : vector<2x1xf32>
    %409 = math.exp %408 : vector<2x1xf32>
    %410 = arith.addf %402, %409 : vector<2x1xf32>
    %411 = vector.extract_strided_slice %332 {offsets = [12, 0], sizes = [2, 32], strides = [1, 1]} : vector<16x32xf32> to vector<2x32xf32>
    %412 = vector.broadcast %409 : vector<2x1xf32> to vector<2x32xf32>
    %413 = arith.mulf %412, %411 : vector<2x32xf32>
    %414 = arith.addf %406, %413 : vector<2x32xf32>
    %415 = vector.extract_strided_slice %341 {offsets = [14, 0], sizes = [2, 1], strides = [1, 1]} : vector<16x1xf32> to vector<2x1xf32>
    %416 = arith.subf %415, %356 : vector<2x1xf32>
    %417 = math.exp %416 : vector<2x1xf32>
    %418 = arith.addf %410, %417 : vector<2x1xf32>
    %419 = vector.extract_strided_slice %332 {offsets = [14, 0], sizes = [2, 32], strides = [1, 1]} : vector<16x32xf32> to vector<2x32xf32>
    %420 = vector.broadcast %417 : vector<2x1xf32> to vector<2x32xf32>
    %421 = arith.mulf %420, %419 : vector<2x32xf32>
    %422 = arith.addf %414, %421 : vector<2x32xf32>
    %423 = vector.broadcast %418 : vector<2x1xf32> to vector<2x32xf32>
    %424 = arith.divf %422, %423 : vector<2x32xf32>
    %425 = arith.truncf %424 : vector<2x32xf32> to vector<2x32xbf16>
    %cst_67 = arith.constant dense<0.000000e+00> : vector<2x128xf32>
    %426 = tpu.matmul %425, %3, %cst_67 {dimension_numbers = #tpu.dot_dimension_numbers<[1], [0], [0], [1], [0, 0, 1, 1], [], []>} : vector<2x32xbf16>, vector<32x128xbf16>, vector<2x128xf32> -> vector<2x128xf32>
    %427 = vector.broadcast %9 : vector<1x128xf32> to vector<2x128xf32>
    %428 = arith.addf %426, %427 : vector<2x128xf32>
    %cst_68 = arith.constant 0.000000e+00 : f32
    %429 = vector.broadcast %cst_68 : f32 to vector<2x128xf32>
    %430 = arith.maximumf %428, %429 : vector<2x128xf32>
    %431 = vector.broadcast %10 : vector<1x128xf32> to vector<2x128xf32>
    %432 = arith.mulf %430, %431 : vector<2x128xf32>
    %cst_69 = arith.constant dense<0.000000e+00> : vector<2xf32>
    %433 = vector.multi_reduction <add>, %432, %cst_69 [1] : vector<2x128xf32> to vector<2xf32>
    %434 = vector.shape_cast %433 : vector<2xf32> to vector<2x1xf32>
    %435 = vector.broadcast %11 : vector<1x1xf32> to vector<2x1xf32>
    %436 = arith.addf %434, %435 : vector<2x1xf32>
    %437 = arith.negf %436 : vector<2x1xf32>
    %438 = math.exp %437 : vector<2x1xf32>
    %cst_70 = arith.constant 1.000000e+00 : f32
    %439 = vector.broadcast %cst_70 : f32 to vector<2x1xf32>
    %440 = arith.addf %439, %438 : vector<2x1xf32>
    %441 = arith.divf %439, %440 : vector<2x1xf32>
    %c0_71 = arith.constant 0 : index
    %c0_72 = arith.constant 0 : index
    %442 = vector.load %arg4[%c0_71, %c0_72] : memref<2x1xf32, #tpu.memory_space<vmem>>, vector<2x1xf32>
    tpu.vector_store %arg4[%c0_71, %c0_72], %441 {strides = array<i32>} : memref<2x1xf32, #tpu.memory_space<vmem>>, vector<2x1xf32>,
    return
  }
  func.func @transform_0(%arg0: i32) -> (i32, i32, i32) {
    %c0_i32 = arith.constant 0 : i32
    %c0_i32_0 = arith.constant 0 : i32
    %c0_i32_1 = arith.constant 0 : i32
    return %arg0, %c0_i32, %c0_i32_0 : i32, i32, i32
  }
  func.func @transform_1(%arg0: i32) -> (i32, i32) {
    %c0_i32 = arith.constant 0 : i32
    %c0_i32_0 = arith.constant 0 : i32
    %c0_i32_1 = arith.constant 0 : i32
    return %c0_i32, %c0_i32_0 : i32, i32
  }
  func.func @transform_2(%arg0: i32) -> (i32, i32) {
    %c0_i32 = arith.constant 0 : i32
    %c0_i32_0 = arith.constant 0 : i32
    %c0_i32_1 = arith.constant 0 : i32
    return %c0_i32, %c0_i32_0 : i32, i32
  }
  func.func @transform_3(%arg0: i32) -> (i32, i32) {
    %c0_i32 = arith.constant 0 : i32
    %c0_i32_0 = arith.constant 0 : i32
    return %arg0, %c0_i32 : i32, i32
  }
}

</mosaic_0001>

<llo_original>
// kernel: fall_detection_forward.1
$region0: #{fall_detection_forward.1}
  #allocation0 [shape = 'u32[]', space=smem, size = 0x4, offset = 0x4, fixed_abs, tag = 'smem constant byte address 0x4 - core index']
  #allocation1 [shape = 'u32[144,128]{1,0:T(1,128)}', space=vmem, size = 0x12000, scoped, tag = 'internal scratch']
  #allocation2 [shape = 'f32[16,128]{1,0:T(8,128)}', space=vmem, size = 0x2000, scoped, tag = 'scratch operand']
  #allocation3 [shape = 'f32[16,32]{1,0:T(8,128)}', space=vmem, size = 0x2000, scoped, tag = 'scratch operand']
  %s0 = inlined_call_operand.vmem [shape: f32[1,16,32], index: 0, kind: input, shape index: {}]
  %s1 = inlined_call_operand.hbm [shape: bf16[160,256], index: 1, kind: input, shape index: {}]
  %s2 = inlined_call_operand.vmem [shape: f32[8,128], index: 2, kind: input, shape index: {}]
  %s3 = inlined_call_operand.vmem [shape: f32[2,1], index: 3, kind: output, shape index: {}]
  %s4 = sld [smem:[#allocation0]]
  $region26: #{fall_detection_forward.1} parent=0
    _
  %s6 = ssub.s32 1, %s4
  %s7 = scalar_select 0, %s6, %s4
  $region1: #{fall_detection_forward.1} parent=0
    #allocation4 [shape = 'u8[81920]{0}', space=vmem, size = 0x14000, scoped, tag = 'input window, operand 1, single buffered']
    #allocation5 [shape = 's32[1]{0}', space=sflag, size = 0x4, scoped, tag = 'scoped memory for fall_detection_forward.1']
    %8 = vsyncpa [#allocation5], 0
    // Predicated region
    $region2: #{fall_detection_forward.1} parent=1 // pred_check
      _
    $region3: #{fall_detection_forward.1} parent=1 // pred_check_branch
      %10 = sbr.rel (0) target = $region5
    $region4: #{fall_detection_forward.1} parent=1 // pred_region
      _
    $region5: #{fall_detection_forward.1} parent=1 // pred_fallthru
      _
    // Predicated region
    $region6: #{fall_detection_forward.1} parent=1 // pred_check
      _
    $region7: #{fall_detection_forward.1} parent=1 // pred_check_branch
      %12 = sbr.rel (0) target = $region9
    $region8: #{fall_detection_forward.1} parent=1 // pred_region
      %s14 = ssub.s32 2560, 2560
      %15 = vsyncadd [#allocation5], %s14
      %s16 = sshll.u32 [#allocation4], 4
      %s17 = int_to_ptr.vmem [resolvable:$true] %s16
      %22 = dma.hbm_to_vmem [thread:$0]  %s1, 2560, %s17, [#allocation5], 128, 128, 8
    $region9: #{fall_detection_forward.1} parent=1 // pred_fallthru
      _
    // Predicated region
    $region10: #{fall_detection_forward.1} parent=1 // pred_check
      _
    $region11: #{fall_detection_forward.1} parent=1 // pred_check_branch
      %24 = sbr.rel (0) target = $region13
    $region12: #{fall_detection_forward.1} parent=1 // pred_region
      _
    $region13: #{fall_detection_forward.1} parent=1 // pred_fallthru
      _
    // Predicated region
    $region14: #{fall_detection_forward.1} parent=1 // pred_check
      _
    $region15: #{fall_detection_forward.1} parent=1 // pred_check_branch
      %26 = sbr.rel (0) target = $region17
    $region16: #{fall_detection_forward.1} parent=1 // pred_region
      %27 = dma.done [#allocation5], 2560
    $region17: #{fall_detection_forward.1} parent=1 // pred_fallthru
      _
    %v29 = vld [vmem:[#allocation4] sm:$0xf]
    %v30 = vld [vmem:[#allocation4 + $0x8] sm:$0xf]
    %v31 = vld [vmem:[#allocation4 + $0x10] sm:$0xf]
    %v32 = vld [vmem:[#allocation4 + $0x18] sm:$0xf]
    %v33 = vld [vmem:[#allocation4 + $0x20] sm:$0xff]
    %v34 = vld [vmem:[#allocation4 + $0x28] sm:$0xff]
    %v35 = vld [vmem:[#allocation4 + $0x30] sm:$0xff]
    %v36 = vld [vmem:[#allocation4 + $0x38] sm:$0xff]
    %v37 = vld [vmem:[#allocation4 + $0x40] sm:$0xff]
    %v38 = vld [vmem:[#allocation4 + $0x48] sm:$0xff]
    %v39 = vld [vmem:[#allocation4 + $0x50] sm:$0xff]
    %v40 = vld [vmem:[#allocation4 + $0x58] sm:$0xff]
    %v41 = vld [vmem:[#allocation4 + $0x60] sm:$0xf]
    %v42 = vld [vmem:[#allocation4 + $0x68] sm:$0xf]
    %v43 = vld [vmem:[#allocation4 + $0x70] sm:$0xf]
    %v44 = vld [vmem:[#allocation4 + $0x78] sm:$0xf]
    %v45 = vld [vmem:[#allocation4 + $0x80] sm:$0xf]
    %v46 = vld [vmem:[#allocation4 + $0x88] sm:$0xf]
    %v47 = vld [vmem:[#allocation4 + $0x90] sm:$0xf]
    %v48 = vld [vmem:[#allocation4 + $0x98] sm:$0xf]
    %v49 = vld [vmem:[%s2] sm:$0xff]
    %v50 = vlaneseq
    %v51 = vshrl.u32 %v50, 7
    %v52 = vsub.s32 1, %v51
    %v53 = vrot.slane %v49, %v52
    %v54 = vld [vmem:[%s0] sm:$0xff]
    %v55 = vld [vmem:[%s0 + $0x8] sm:$0xff]
    %v56 = vpack.c.bf16 %v55, %v54
    %v57 = vlaneseq
    %v58 = vshrl.u32 %v57, 7
    %v59 = vsub.s32 0, %v58
    %v60 = vrot.slane %v49, %v59
    %v65 = vunpack.c.l.b16 %v29
    %v66 = vunpack.c.l.b16 %v30
    %v67 = vunpack.c.l.b16 %v31
    %v68 = vunpack.c.l.b16 %v32
    %v69 = vpack.c.b16 %v66, %v65
    %v70 = vpack.c.b16 %v68, %v67
    %vm73 = vcmask 261120
    %v75 = vsel %vm73, %v56, 0
    %77 = vmatprep.subr.bf16.mxu0 0
    %78 = vmatpush1.bf16.msra.mxu0 %v69
    %79 = vmatprep.subr.bf16.mxu0 0
    %80 = vmatpush1.bf16.msra.mxu0 %v70
    %81 = vmatprep.subr.bf16.mxu0 0
    %82 = vmatpush1.bf16.msra.mxu0 0
    %83 = vmatprep.subr.bf16.mxu0 0
    %84 = vmatpush1.bf16.msra.mxu0 0
    %85 = vmatprep.subr.bf16.mxu0 0
    %86 = vmatpush1.bf16.msra.mxu0 0
    %87 = vmatprep.subr.bf16.mxu0 0
    %88 = vmatpush1.bf16.msra.mxu0 0
    %89 = vmatprep.subr.bf16.mxu0 0
    %90 = vmatpush1.bf16.msra.mxu0 0
    %91 = vmatprep.subr.bf16.mxu0 0
    %92 = vmatpush1.bf16.msra.mxu0 0
    %93 = vmatprep.subr.bf16.mxu0 0
    %94 = vmatpush1.bf16.msra.mxu0 0
    %95 = vmatprep.subr.bf16.mxu0 0
    %96 = vmatpush1.bf16.msra.mxu0 0
    %97 = vmatprep.subr.bf16.mxu0 0
    %98 = vmatpush1.bf16.msra.mxu0 0
    %99 = vmatprep.subr.bf16.mxu0 0
    %100 = vmatpush1.bf16.msra.mxu0 0
    %101 = vmatprep.subr.bf16.mxu0 0
    %102 = vmatpush1.bf16.msra.mxu0 0
    %103 = vmatprep.subr.bf16.mxu0 0
    %104 = vmatpush1.bf16.msra.mxu0 0
    %105 = vmatprep.subr.bf16.mxu0 0
    %106 = vmatpush1.bf16.msra.mxu0 0
    %107 = vmatprep.subr.bf16.mxu0 0
    %108 = vmatpush1.bf16.msra.mxu0 0
    %109 = vmatprep.mubr.bf16.mxu0 0
    %110 = vmatmul.mubr.bf16.gmra.mrb[0].mxu0 %v75
    %v111 = vpop.f32.mrb[0].mxu0
    %v112 = vadd.f32 %v60, %v111
    %v113 = vpop.f32.mrb[0].mxu0
    %v114 = vpop.f32.mrb[0].mxu0
    %v115 = vadd.f32 %v60, %v114
    %v116 = vpop.f32.mrb[0].mxu0
    %117 = vdwg.mxu0
    %118 = vst [vmem:[#allocation2] sm:$0xff] %v112
    %119 = vst [vmem:[#allocation2 + $0x8] sm:$0xff] %v115
    %v120 = vld [vmem:[#allocation2] sm:$0x3]
    %v121 = vxor.u32 %v120, 2147483648
    %v122 = vmul.f32 %v121, 1.442695
    %v123 = vpow.pop %v122
    %v124 = vadd.f32 %v123, 1.0
    %v125 = vrcp.pop %v124
    %v126 = vmul.f32 1.0, %v125
    %v127 = vtanh.pop %v120
    %v128 = vmul.f32 %v126, 0.0
    %130 = vrot.lane.b32.xlu0 %v127, 64
    %v131 = vpop.permute.xlu0 %130
    %v133 = vmul.f32 %v126, %v131
    %135 = vrot.lane.b32.xlu0 %v133, 32
    %v136 = vpop.permute.xlu0 %135
    %v138 = vadd.f32 %v128, %v136
    %v139 = vtanh.pop %v138
    %141 = vrot.lane.b32.xlu0 %v139, 64
    %v142 = vpop.permute.xlu0 %141
    %v144 = vmul.f32 %v126, %v142
    %146 = vrot.lane.b32.xlu0 %v144, 32
    %v147 = vpop.permute.xlu0 %146
    %v149 = vsel %vm73, %v147, 0.0
    %v150 = vpack.c.bf16 %v149, %v149
    %v159 = vunpack.c.l.b16 %v33
    %v160 = vunpack.c.h.b16 %v33
    %v161 = vunpack.c.l.b16 %v34
    %v162 = vunpack.c.h.b16 %v34
    %v163 = vunpack.c.l.b16 %v35
    %v164 = vunpack.c.h.b16 %v35
    %v165 = vunpack.c.l.b16 %v36
    %v166 = vunpack.c.h.b16 %v36
    %v167 = vunpack.c.l.b16 %v37
    %v168 = vunpack.c.h.b16 %v37
    %v169 = vunpack.c.l.b16 %v38
    %v170 = vunpack.c.h.b16 %v38
    %v171 = vunpack.c.l.b16 %v39
    %v172 = vunpack.c.h.b16 %v39
    %v173 = vunpack.c.l.b16 %v40
    %v174 = vunpack.c.h.b16 %v40
    %v175 = vpack.c.b16 %v161, %v159
    %v176 = vpack.c.b16 %v162, %v160
    %v177 = vpack.c.b16 %v165, %v163
    %v178 = vpack.c.b16 %v166, %v164
    %v179 = vpack.c.b16 %v169, %v167
    %v180 = vpack.c.b16 %v170, %v168
    %v181 = vpack.c.b16 %v173, %v171
    %v182 = vpack.c.b16 %v174, %v172
    %vm191 = vcmask 523264
    %v193 = vsel %vm191, %v150, 0
    %195 = vmatprep.subr.bf16.mxu0 %v176
    %196 = vmatpush1.bf16.msra.mxu0 %v175
    %197 = vmatprep.subr.bf16.mxu0 %v178
    %198 = vmatpush1.bf16.msra.mxu0 %v177
    %199 = vmatprep.subr.bf16.mxu0 %v180
    %200 = vmatpush1.bf16.msra.mxu0 %v179
    %201 = vmatprep.subr.bf16.mxu0 %v182
    %202 = vmatpush1.bf16.msra.mxu0 %v181
    %203 = vmatprep.subr.bf16.mxu0 0
    %204 = vmatpush1.bf16.msra.mxu0 0
    %205 = vmatprep.subr.bf16.mxu0 0
    %206 = vmatpush1.bf16.msra.mxu0 0
    %207 = vmatprep.subr.bf16.mxu0 0
    %208 = vmatpush1.bf16.msra.mxu0 0
    %209 = vmatprep.subr.bf16.mxu0 0
    %210 = vmatpush1.bf16.msra.mxu0 0
    %211 = vmatprep.subr.bf16.mxu0 0
    %212 = vmatpush1.bf16.msra.mxu0 0
    %213 = vmatprep.subr.bf16.mxu0 0
    %214 = vmatpush1.bf16.msra.mxu0 0
    %215 = vmatprep.subr.bf16.mxu0 0
    %216 = vmatpush1.bf16.msra.mxu0 0
    %217 = vmatprep.subr.bf16.mxu0 0
    %218 = vmatpush1.bf16.msra.mxu0 0
    %219 = vmatprep.subr.bf16.mxu0 0
    %220 = vmatpush1.bf16.msra.mxu0 0
    %221 = vmatprep.subr.bf16.mxu0 0
    %222 = vmatpush1.bf16.msra.mxu0 0
    %223 = vmatprep.subr.bf16.mxu0 0
    %224 = vmatpush1.bf16.msra.mxu0 0
    %225 = vmatprep.subr.bf16.mxu0 0
    %226 = vmatpush1.bf16.msra.mxu0 0
    %227 = vmatprep.mubr.bf16.mxu0 0
    %228 = vmatmul.mubr.bf16.gmra.mrb[0].mxu0 %v193
    %v229 = vpop.f32.mrb[0].mxu0
    %v230 = vadd.f32 0.0, %v229
    %v231 = vpop.f32.mrb[0].mxu0
    %v232 = vadd.f32 0.0, %v231
    %v233 = vpop.f32.mrb[0].mxu0
    %v234 = vpop.f32.mrb[0].mxu0
    %235 = vdwg.mxu0
    %v236 = vld [vmem:[#allocation2 + $0x2] sm:$0x3]
    %v237 = vadd.f32 %v236, %v230
    %v238 = vadd.f32 %v232, %v53
    %v239 = vxor.u32 %v238, 2147483648
    %v240 = vmul.f32 %v239, 1.442695
    %v241 = vpow.pop %v240
    %v242 = vadd.f32 %v241, 1.0
    %v243 = vrcp.pop %v242
    %v244 = vmul.f32 1.0, %v243
    %v245 = vtanh.pop %v238
    %v246 = vmul.f32 %v244, 0.0
    %248 = vrot.lane.b32.xlu0 %v245, 64
    %v249 = vpop.permute.xlu0 %248
    %v251 = vmul.f32 %v244, %v249
    %253 = vrot.lane.b32.xlu0 %v251, 32
    %v254 = vpop.permute.xlu0 %253
    %v256 = vadd.f32 %v246, %v254
    %v257 = vtanh.pop %v256
    %259 = vrot.lane.b32.xlu0 %v257, 64
    %v260 = vpop.permute.xlu0 %259
    %v262 = vmul.f32 %v244, %v260
    %v263 = vxor.u32 %v237, 2147483648
    %v264 = vmul.f32 %v263, 1.442695
    %v265 = vpow.pop %v264
    %v266 = vadd.f32 %v265, 1.0
    %v267 = vrcp.pop %v266
    %v268 = vmul.f32 1.0, %v267
    %v269 = vtanh.pop %v237
    %v270 = vmul.f32 %v268, %v138
    %272 = vrot.lane.b32.xlu0 %v269, 64
    %v273 = vpop.permute.xlu0 %272
    %v275 = vmul.f32 %v268, %v273
    %277 = vrot.lane.b32.xlu0 %v275, 32
    %v278 = vpop.permute.xlu0 %277
    %v280 = vadd.f32 %v270, %v278
    %v281 = vtanh.pop %v280
    %283 = vrot.lane.b32.xlu0 %v281, 64
    %v284 = vpop.permute.xlu0 %283
    %v286 = vmul.f32 %v268, %v284
    %288 = vrot.lane.b32.xlu0 %v262, 32
    %v289 = vpop.permute.xlu0 %288
    %vm291 = vcmask 254976
    %292 = vst.msk [vmem:[#allocation3] sm:$0x3] %vm291, %v289
    %294 = vrot.lane.b32.xlu0 %v286, 32
    %v295 = vpop.permute.xlu0 %294
    %297 = vrot.lane.b32.xlu0 %v262, 64
    %v298 = vpop.permute.xlu0 %297
    %v300 = vsel %vm73, %v295, %v298
    %v301 = vpack.c.bf16 %v300, %v300
    %v303 = vsel %vm191, %v301, 0
    %305 = vmatprep.subr.bf16.mxu0 %v176
    %306 = vmatpush1.bf16.msra.mxu0 %v175
    %307 = vmatprep.subr.bf16.mxu0 %v178
    %308 = vmatpush1.bf16.msra.mxu0 %v177
    %309 = vmatprep.subr.bf16.mxu0 %v180
    %310 = vmatpush1.bf16.msra.mxu0 %v179
    %311 = vmatprep.subr.bf16.mxu0 %v182
    %312 = vmatpush1.bf16.msra.mxu0 %v181
    %313 = vmatprep.subr.bf16.mxu0 0
    %314 = vmatpush1.bf16.msra.mxu0 0
    %315 = vmatprep.subr.bf16.mxu0 0
    %316 = vmatpush1.bf16.msra.mxu0 0
    %317 = vmatprep.subr.bf16.mxu0 0
    %318 = vmatpush1.bf16.msra.mxu0 0
    %319 = vmatprep.subr.bf16.mxu0 0
    %320 = vmatpush1.bf16.msra.mxu0 0
    %321 = vmatprep.subr.bf16.mxu0 0
    %322 = vmatpush1.bf16.msra.mxu0 0
    %323 = vmatprep.subr.bf16.mxu0 0
    %324 = vmatpush1.bf16.msra.mxu0 0
    %325 = vmatprep.subr.bf16.mxu0 0
    %326 = vmatpush1.bf16.msra.mxu0 0
    %327 = vmatprep.subr.bf16.mxu0 0
    %328 = vmatpush1.bf16.msra.mxu0 0
    %329 = vmatprep.subr.bf16.mxu0 0
    %330 = vmatpush1.bf16.msra.mxu0 0
    %331 = vmatprep.subr.bf16.mxu0 0
    %332 = vmatpush1.bf16.msra.mxu0 0
    %333 = vmatprep.subr.bf16.mxu0 0
    %334 = vmatpush1.bf16.msra.mxu0 0
    %335 = vmatprep.subr.bf16.mxu0 0
    %336 = vmatpush1.bf16.msra.mxu0 0
    %337 = vmatprep.mubr.bf16.mxu0 0
    %338 = vmatmul.mubr.bf16.gmra.mrb[0].mxu0 %v303
    %v339 = vpop.f32.mrb[0].mxu0
    %v340 = vadd.f32 0.0, %v339
    %v341 = vpop.f32.mrb[0].mxu0
    %v342 = vadd.f32 0.0, %v341
    %v343 = vpop.f32.mrb[0].mxu0
    %v344 = vpop.f32.mrb[0].mxu0
    %345 = vdwg.mxu0
    %v346 = vld [vmem:[#allocation2 + $0x4] sm:$0x3]
    %v347 = vadd.f32 %v346, %v340
    %v348 = vadd.f32 %v342, %v53
    %v349 = vxor.u32 %v348, 2147483648
    %v350 = vmul.f32 %v349, 1.442695
    %v351 = vpow.pop %v350
    %v352 = vadd.f32 %v351, 1.0
    %v353 = vrcp.pop %v352
    %v354 = vmul.f32 1.0, %v353
    %v355 = vtanh.pop %v348
    %v356 = vmul.f32 %v354, %v256
    %358 = vrot.lane.b32.xlu0 %v355, 64
    %v359 = vpop.permute.xlu0 %358
    %v361 = vmul.f32 %v354, %v359
    %363 = vrot.lane.b32.xlu0 %v361, 32
    %v364 = vpop.permute.xlu0 %363
    %v366 = vadd.f32 %v356, %v364
    %v367 = vtanh.pop %v366
    %369 = vrot.lane.b32.xlu0 %v367, 64
    %v370 = vpop.permute.xlu0 %369
    %v372 = vmul.f32 %v354, %v370
    %v373 = vxor.u32 %v347, 2147483648
    %v374 = vmul.f32 %v373, 1.442695
    %v375 = vpow.pop %v374
    %v376 = vadd.f32 %v375, 1.0
    %v377 = vrcp.pop %v376
    %v378 = vmul.f32 1.0, %v377
    %v379 = vtanh.pop %v347
    %v380 = vmul.f32 %v378, %v280
    %382 = vrot.lane.b32.xlu0 %v379, 64
    %v383 = vpop.permute.xlu0 %382
    %v385 = vmul.f32 %v378, %v383
    %387 = vrot.lane.b32.xlu0 %v385, 32
    %v388 = vpop.permute.xlu0 %387
    %v390 = vadd.f32 %v380, %v388
    %v391 = vtanh.pop %v390
    %393 = vrot.lane.b32.xlu0 %v391, 64
    %v394 = vpop.permute.xlu0 %393
    %v396 = vmul.f32 %v378, %v394
    %398 = vrot.lane.b32.xlu0 %v372, 32
    %v399 = vpop.permute.xlu0 %398
    %401 = vst.msk [vmem:[#allocation3 + $0x2] sm:$0x3] %vm291, %v399
    %403 = vrot.lane.b32.xlu0 %v396, 32
    %v404 = vpop.permute.xlu0 %403
    %406 = vrot.lane.b32.xlu0 %v372, 64
    %v407 = vpop.permute.xlu0 %406
    %v409 = vsel %vm73, %v404, %v407
    %v410 = vpack.c.bf16 %v409, %v409
    %v412 = vsel %vm191, %v410, 0
    %414 = vmatprep.subr.bf16.mxu0 %v176
    %415 = vmatpush1.bf16.msra.mxu0 %v175
    %416 = vmatprep.subr.bf16.mxu0 %v178
    %417 = vmatpush1.bf16.msra.mxu0 %v177
    %418 = vmatprep.subr.bf16.mxu0 %v180
    %419 = vmatpush1.bf16.msra.mxu0 %v179
    %420 = vmatprep.subr.bf16.mxu0 %v182
    %421 = vmatpush1.bf16.msra.mxu0 %v181
    %422 = vmatprep.subr.bf16.mxu0 0
    %423 = vmatpush1.bf16.msra.mxu0 0
    %424 = vmatprep.subr.bf16.mxu0 0
    %425 = vmatpush1.bf16.msra.mxu0 0
    %426 = vmatprep.subr.bf16.mxu0 0
    %427 = vmatpush1.bf16.msra.mxu0 0
    %428 = vmatprep.subr.bf16.mxu0 0
    %429 = vmatpush1.bf16.msra.mxu0 0
    %430 = vmatprep.subr.bf16.mxu0 0
    %431 = vmatpush1.bf16.msra.mxu0 0
    %432 = vmatprep.subr.bf16.mxu0 0
    %433 = vmatpush1.bf16.msra.mxu0 0
    %434 = vmatprep.subr.bf16.mxu0 0
    %435 = vmatpush1.bf16.msra.mxu0 0
    %436 = vmatprep.subr.bf16.mxu0 0
    %437 = vmatpush1.bf16.msra.mxu0 0
    %438 = vmatprep.subr.bf16.mxu0 0
    %439 = vmatpush1.bf16.msra.mxu0 0
    %440 = vmatprep.subr.bf16.mxu0 0
    %441 = vmatpush1.bf16.msra.mxu0 0
    %442 = vmatprep.subr.bf16.mxu0 0
    %443 = vmatpush1.bf16.msra.mxu0 0
    %444 = vmatprep.subr.bf16.mxu0 0
    %445 = vmatpush1.bf16.msra.mxu0 0
    %446 = vmatprep.mubr.bf16.mxu0 0
    %447 = vmatmul.mubr.bf16.gmra.mrb[0].mxu0 %v412
    %v448 = vpop.f32.mrb[0].mxu0
    %v449 = vadd.f32 0.0, %v448
    %v450 = vpop.f32.mrb[0].mxu0
    %v451 = vadd.f32 0.0, %v450
    %v452 = vpop.f32.mrb[0].mxu0
    %v453 = vpop.f32.mrb[0].mxu0
    %454 = vdwg.mxu0
    %v455 = vld [vmem:[#allocation2 + $0x6] sm:$0x3]
    %v456 = vadd.f32 %v455, %v449
    %v457 = vadd.f32 %v451, %v53
    %v458 = vxor.u32 %v457, 2147483648
    %v459 = vmul.f32 %v458, 1.442695
    %v460 = vpow.pop %v459
    %v461 = vadd.f32 %v460, 1.0
    %v462 = vrcp.pop %v461
    %v463 = vmul.f32 1.0, %v462
    %v464 = vtanh.pop %v457
    %v465 = vmul.f32 %v463, %v366
    %467 = vrot.lane.b32.xlu0 %v464, 64
    %v468 = vpop.permute.xlu0 %467
    %v470 = vmul.f32 %v463, %v468
    %472 = vrot.lane.b32.xlu0 %v470, 32
    %v473 = vpop.permute.xlu0 %472
    %v475 = vadd.f32 %v465, %v473
    %v476 = vtanh.pop %v475
    %478 = vrot.lane.b32.xlu0 %v476, 64
    %v479 = vpop.permute.xlu0 %478
    %v481 = vmul.f32 %v463, %v479
    %v482 = vxor.u32 %v456, 2147483648
    %v483 = vmul.f32 %v482, 1.442695
    %v484 = vpow.pop %v483
    %v485 = vadd.f32 %v484, 1.0
    %v486 = vrcp.pop %v485
    %v487 = vmul.f32 1.0, %v486
    %v488 = vtanh.pop %v456
    %v489 = vmul.f32 %v487, %v390
    %491 = vrot.lane.b32.xlu0 %v488, 64
    %v492 = vpop.permute.xlu0 %491
    %v494 = vmul.f32 %v487, %v492
    %496 = vrot.lane.b32.xlu0 %v494, 32
    %v497 = vpop.permute.xlu0 %496
    %v499 = vadd.f32 %v489, %v497
    %v500 = vtanh.pop %v499
    %502 = vrot.lane.b32.xlu0 %v500, 64
    %v503 = vpop.permute.xlu0 %502
    %v505 = vmul.f32 %v487, %v503
    %507 = vrot.lane.b32.xlu0 %v481, 32
    %v508 = vpop.permute.xlu0 %507
    %510 = vst.msk [vmem:[#allocation3 + $0x4] sm:$0x3] %vm291, %v508
    %512 = vrot.lane.b32.xlu0 %v505, 32
    %v513 = vpop.permute.xlu0 %512
    %515 = vrot.lane.b32.xlu0 %v481, 64
    %v516 = vpop.permute.xlu0 %515
    %v518 = vsel %vm73, %v513, %v516
    %v519 = vpack.c.bf16 %v518, %v518
    %v521 = vsel %vm191, %v519, 0
    %523 = vmatprep.subr.bf16.mxu0 %v176
    %524 = vmatpush1.bf16.msra.mxu0 %v175
    %525 = vmatprep.subr.bf16.mxu0 %v178
    %526 = vmatpush1.bf16.msra.mxu0 %v177
    %527 = vmatprep.subr.bf16.mxu0 %v180
    %528 = vmatpush1.bf16.msra.mxu0 %v179
    %529 = vmatprep.subr.bf16.mxu0 %v182
    %530 = vmatpush1.bf16.msra.mxu0 %v181
    %531 = vmatprep.subr.bf16.mxu0 0
    %532 = vmatpush1.bf16.msra.mxu0 0
    %533 = vmatprep.subr.bf16.mxu0 0
    %534 = vmatpush1.bf16.msra.mxu0 0
    %535 = vmatprep.subr.bf16.mxu0 0
    %536 = vmatpush1.bf16.msra.mxu0 0
    %537 = vmatprep.subr.bf16.mxu0 0
    %538 = vmatpush1.bf16.msra.mxu0 0
    %539 = vmatprep.subr.bf16.mxu0 0
    %540 = vmatpush1.bf16.msra.mxu0 0
    %541 = vmatprep.subr.bf16.mxu0 0
    %542 = vmatpush1.bf16.msra.mxu0 0
    %543 = vmatprep.subr.bf16.mxu0 0
    %544 = vmatpush1.bf16.msra.mxu0 0
    %545 = vmatprep.subr.bf16.mxu0 0
    %546 = vmatpush1.bf16.msra.mxu0 0
    %547 = vmatprep.subr.bf16.mxu0 0
    %548 = vmatpush1.bf16.msra.mxu0 0
    %549 = vmatprep.subr.bf16.mxu0 0
    %550 = vmatpush1.bf16.msra.mxu0 0
    %551 = vmatprep.subr.bf16.mxu0 0
    %552 = vmatpush1.bf16.msra.mxu0 0
    %553 = vmatprep.subr.bf16.mxu0 0
    %554 = vmatpush1.bf16.msra.mxu0 0
    %555 = vmatprep.mubr.bf16.mxu0 0
    %556 = vmatmul.mubr.bf16.gmra.mrb[0].mxu0 %v521
    %v557 = vpop.f32.mrb[0].mxu0
    %v558 = vadd.f32 0.0, %v557
    %v559 = vpop.f32.mrb[0].mxu0
    %v560 = vadd.f32 0.0, %v559
    %v561 = vpop.f32.mrb[0].mxu0
    %v562 = vpop.f32.mrb[0].mxu0
    %563 = vdwg.mxu0
    %v564 = vld [vmem:[#allocation2 + $0x8] sm:$0x3]
    %v565 = vadd.f32 %v564, %v558
    %v566 = vadd.f32 %v560, %v53
    %v567 = vxor.u32 %v566, 2147483648
    %v568 = vmul.f32 %v567, 1.442695
    %v569 = vpow.pop %v568
    %v570 = vadd.f32 %v569, 1.0
    %v571 = vrcp.pop %v570
    %v572 = vmul.f32 1.0, %v571
    %v573 = vtanh.pop %v566
    %v574 = vmul.f32 %v572, %v475
    %576 = vrot.lane.b32.xlu0 %v573, 64
    %v577 = vpop.permute.xlu0 %576
    %v579 = vmul.f32 %v572, %v577
    %581 = vrot.lane.b32.xlu0 %v579, 32
    %v582 = vpop.permute.xlu0 %581
    %v584 = vadd.f32 %v574, %v582
    %v585 = vtanh.pop %v584
    %587 = vrot.lane.b32.xlu0 %v585, 64
    %v588 = vpop.permute.xlu0 %587
    %v590 = vmul.f32 %v572, %v588
    %v591 = vxor.u32 %v565, 2147483648
    %v592 = vmul.f32 %v591, 1.442695
    %v593 = vpow.pop %v592
    %v594 = vadd.f32 %v593, 1.0
    %v595 = vrcp.pop %v594
    %v596 = vmul.f32 1.0, %v595
    %v597 = vtanh.pop %v565
    %v598 = vmul.f32 %v596, %v499
    %600 = vrot.lane.b32.xlu0 %v597, 64
    %v601 = vpop.permute.xlu0 %600
    %v603 = vmul.f32 %v596, %v601
    %605 = vrot.lane.b32.xlu0 %v603, 32
    %v606 = vpop.permute.xlu0 %605
    %v608 = vadd.f32 %v598, %v606
    %v609 = vtanh.pop %v608
    %611 = vrot.lane.b32.xlu0 %v609, 64
    %v612 = vpop.permute.xlu0 %611
    %v614 = vmul.f32 %v596, %v612
    %616 = vrot.lane.b32.xlu0 %v590, 32
    %v617 = vpop.permute.xlu0 %616
    %619 = vst.msk [vmem:[#allocation3 + $0x6] sm:$0x3] %vm291, %v617
    %621 = vrot.lane.b32.xlu0 %v614, 32
    %v622 = vpop.permute.xlu0 %621
    %624 = vrot.lane.b32.xlu0 %v590, 64
    %v625 = vpop.permute.xlu0 %624
    %v627 = vsel %vm73, %v622, %v625
    %v628 = vpack.c.bf16 %v627, %v627
    %v630 = vsel %vm191, %v628, 0
    %632 = vmatprep.subr.bf16.mxu0 %v176
    %633 = vmatpush1.bf16.msra.mxu0 %v175
    %634 = vmatprep.subr.bf16.mxu0 %v178
    %635 = vmatpush1.bf16.msra.mxu0 %v177
    %636 = vmatprep.subr.bf16.mxu0 %v180
    %637 = vmatpush1.bf16.msra.mxu0 %v179
    %638 = vmatprep.subr.bf16.mxu0 %v182
    %639 = vmatpush1.bf16.msra.mxu0 %v181
    %640 = vmatprep.subr.bf16.mxu0 0
    %641 = vmatpush1.bf16.msra.mxu0 0
    %642 = vmatprep.subr.bf16.mxu0 0
    %643 = vmatpush1.bf16.msra.mxu0 0
    %644 = vmatprep.subr.bf16.mxu0 0
    %645 = vmatpush1.bf16.msra.mxu0 0
    %646 = vmatprep.subr.bf16.mxu0 0
    %647 = vmatpush1.bf16.msra.mxu0 0
    %648 = vmatprep.subr.bf16.mxu0 0
    %649 = vmatpush1.bf16.msra.mxu0 0
    %650 = vmatprep.subr.bf16.mxu0 0
    %651 = vmatpush1.bf16.msra.mxu0 0
    %652 = vmatprep.subr.bf16.mxu0 0
    %653 = vmatpush1.bf16.msra.mxu0 0
    %654 = vmatprep.subr.bf16.mxu0 0
    %655 = vmatpush1.bf16.msra.mxu0 0
    %656 = vmatprep.subr.bf16.mxu0 0
    %657 = vmatpush1.bf16.msra.mxu0 0
    %658 = vmatprep.subr.bf16.mxu0 0
    %659 = vmatpush1.bf16.msra.mxu0 0
    %660 = vmatprep.subr.bf16.mxu0 0
    %661 = vmatpush1.bf16.msra.mxu0 0
    %662 = vmatprep.subr.bf16.mxu0 0
    %663 = vmatpush1.bf16.msra.mxu0 0
    %664 = vmatprep.mubr.bf16.mxu0 0
    %665 = vmatmul.mubr.bf16.gmra.mrb[0].mxu0 %v630
    %v666 = vpop.f32.mrb[0].mxu0
    %v667 = vadd.f32 0.0, %v666
    %v668 = vpop.f32.mrb[0].mxu0
    %v669 = vadd.f32 0.0, %v668
    %v670 = vpop.f32.mrb[0].mxu0
    %v671 = vpop.f32.mrb[0].mxu0
    %672 = vdwg.mxu0
    %v673 = vld [vmem:[#allocation2 + $0xa] sm:$0x3]
    %v674 = vadd.f32 %v673, %v667
    %v675 = vadd.f32 %v669, %v53
    %v676 = vxor.u32 %v675, 2147483648
    %v677 = vmul.f32 %v676, 1.442695
    %v678 = vpow.pop %v677
    %v679 = vadd.f32 %v678, 1.0
    %v680 = vrcp.pop %v679
    %v681 = vmul.f32 1.0, %v680
    %v682 = vtanh.pop %v675
    %v683 = vmul.f32 %v681, %v584
    %685 = vrot.lane.b32.xlu0 %v682, 64
    %v686 = vpop.permute.xlu0 %685
    %v688 = vmul.f32 %v681, %v686
    %690 = vrot.lane.b32.xlu0 %v688, 32
    %v691 = vpop.permute.xlu0 %690
    %v693 = vadd.f32 %v683, %v691
    %v694 = vtanh.pop %v693
    %696 = vrot.lane.b32.xlu0 %v694, 64
    %v697 = vpop.permute.xlu0 %696
    %v699 = vmul.f32 %v681, %v697
    %v700 = vxor.u32 %v674, 2147483648
    %v701 = vmul.f32 %v700, 1.442695
    %v702 = vpow.pop %v701
    %v703 = vadd.f32 %v702, 1.0
    %v704 = vrcp.pop %v703
    %v705 = vmul.f32 1.0, %v704
    %v706 = vtanh.pop %v674
    %v707 = vmul.f32 %v705, %v608
    %709 = vrot.lane.b32.xlu0 %v706, 64
    %v710 = vpop.permute.xlu0 %709
    %v712 = vmul.f32 %v705, %v710
    %714 = vrot.lane.b32.xlu0 %v712, 32
    %v715 = vpop.permute.xlu0 %714
    %v717 = vadd.f32 %v707, %v715
    %v718 = vtanh.pop %v717
    %720 = vrot.lane.b32.xlu0 %v718, 64
    %v721 = vpop.permute.xlu0 %720
    %v723 = vmul.f32 %v705, %v721
    %725 = vrot.lane.b32.xlu0 %v699, 32
    %v726 = vpop.permute.xlu0 %725
    %728 = vst.msk [vmem:[#allocation3 + $0x8] sm:$0x3] %vm291, %v726
    %730 = vrot.lane.b32.xlu0 %v723, 32
    %v731 = vpop.permute.xlu0 %730
    %733 = vrot.lane.b32.xlu0 %v699, 64
    %v734 = vpop.permute.xlu0 %733
    %v736 = vsel %vm73, %v731, %v734
    %v737 = vpack.c.bf16 %v736, %v736
    %v739 = vsel %vm191, %v737, 0
    %741 = vmatprep.subr.bf16.mxu0 %v176
    %742 = vmatpush1.bf16.msra.mxu0 %v175
    %743 = vmatprep.subr.bf16.mxu0 %v178
    %744 = vmatpush1.bf16.msra.mxu0 %v177
    %745 = vmatprep.subr.bf16.mxu0 %v180
    %746 = vmatpush1.bf16.msra.mxu0 %v179
    %747 = vmatprep.subr.bf16.mxu0 %v182
    %748 = vmatpush1.bf16.msra.mxu0 %v181
    %749 = vmatprep.subr.bf16.mxu0 0
    %750 = vmatpush1.bf16.msra.mxu0 0
    %751 = vmatprep.subr.bf16.mxu0 0
    %752 = vmatpush1.bf16.msra.mxu0 0
    %753 = vmatprep.subr.bf16.mxu0 0
    %754 = vmatpush1.bf16.msra.mxu0 0
    %755 = vmatprep.subr.bf16.mxu0 0
    %756 = vmatpush1.bf16.msra.mxu0 0
    %757 = vmatprep.subr.bf16.mxu0 0
    %758 = vmatpush1.bf16.msra.mxu0 0
    %759 = vmatprep.subr.bf16.mxu0 0
    %760 = vmatpush1.bf16.msra.mxu0 0
    %761 = vmatprep.subr.bf16.mxu0 0
    %762 = vmatpush1.bf16.msra.mxu0 0
    %763 = vmatprep.subr.bf16.mxu0 0
    %764 = vmatpush1.bf16.msra.mxu0 0
    %765 = vmatprep.subr.bf16.mxu0 0
    %766 = vmatpush1.bf16.msra.mxu0 0
    %767 = vmatprep.subr.bf16.mxu0 0
    %768 = vmatpush1.bf16.msra.mxu0 0
    %769 = vmatprep.subr.bf16.mxu0 0
    %770 = vmatpush1.bf16.msra.mxu0 0
    %771 = vmatprep.subr.bf16.mxu0 0
    %772 = vmatpush1.bf16.msra.mxu0 0
    %773 = vmatprep.mubr.bf16.mxu0 0
    %774 = vmatmul.mubr.bf16.gmra.mrb[0].mxu0 %v739
    %v775 = vpop.f32.mrb[0].mxu0
    %v776 = vadd.f32 0.0, %v775
    %v777 = vpop.f32.mrb[0].mxu0
    %v778 = vadd.f32 0.0, %v777
    %v779 = vpop.f32.mrb[0].mxu0
    %v780 = vpop.f32.mrb[0].mxu0
    %781 = vdwg.mxu0
    %v782 = vld [vmem:[#allocation2 + $0xc] sm:$0x3]
    %v783 = vadd.f32 %v782, %v776
    %v784 = vadd.f32 %v778, %v53
    %v785 = vxor.u32 %v784, 2147483648
    %v786 = vmul.f32 %v785, 1.442695
    %v787 = vpow.pop %v786
    %v788 = vadd.f32 %v787, 1.0
    %v789 = vrcp.pop %v788
    %v790 = vmul.f32 1.0, %v789
    %v791 = vtanh.pop %v784
    %v792 = vmul.f32 %v790, %v693
    %794 = vrot.lane.b32.xlu0 %v791, 64
    %v795 = vpop.permute.xlu0 %794
    %v797 = vmul.f32 %v790, %v795
    %799 = vrot.lane.b32.xlu0 %v797, 32
    %v800 = vpop.permute.xlu0 %799
    %v802 = vadd.f32 %v792, %v800
    %v803 = vtanh.pop %v802
    %805 = vrot.lane.b32.xlu0 %v803, 64
    %v806 = vpop.permute.xlu0 %805
    %v808 = vmul.f32 %v790, %v806
    %v809 = vxor.u32 %v783, 2147483648
    %v810 = vmul.f32 %v809, 1.442695
    %v811 = vpow.pop %v810
    %v812 = vadd.f32 %v811, 1.0
    %v813 = vrcp.pop %v812
    %v814 = vmul.f32 1.0, %v813
    %v815 = vtanh.pop %v783
    %v816 = vmul.f32 %v814, %v717
    %818 = vrot.lane.b32.xlu0 %v815, 64
    %v819 = vpop.permute.xlu0 %818
    %v821 = vmul.f32 %v814, %v819
    %823 = vrot.lane.b32.xlu0 %v821, 32
    %v824 = vpop.permute.xlu0 %823
    %v826 = vadd.f32 %v816, %v824
    %v827 = vtanh.pop %v826
    %829 = vrot.lane.b32.xlu0 %v827, 64
    %v830 = vpop.permute.xlu0 %829
    %v832 = vmul.f32 %v814, %v830
    %834 = vrot.lane.b32.xlu0 %v808, 32
    %v835 = vpop.permute.xlu0 %834
    %837 = vst.msk [vmem:[#allocation3 + $0xa] sm:$0x3] %vm291, %v835
    %839 = vrot.lane.b32.xlu0 %v832, 32
    %v840 = vpop.permute.xlu0 %839
    %842 = vrot.lane.b32.xlu0 %v808, 64
    %v843 = vpop.permute.xlu0 %842
    %v845 = vsel %vm73, %v840, %v843
    %v846 = vpack.c.bf16 %v845, %v845
    %v848 = vsel %vm191, %v846, 0
    %850 = vmatprep.subr.bf16.mxu0 %v176
    %851 = vmatpush1.bf16.msra.mxu0 %v175
    %852 = vmatprep.subr.bf16.mxu0 %v178
    %853 = vmatpush1.bf16.msra.mxu0 %v177
    %854 = vmatprep.subr.bf16.mxu0 %v180
    %855 = vmatpush1.bf16.msra.mxu0 %v179
    %856 = vmatprep.subr.bf16.mxu0 %v182
    %857 = vmatpush1.bf16.msra.mxu0 %v181
    %858 = vmatprep.subr.bf16.mxu0 0
    %859 = vmatpush1.bf16.msra.mxu0 0
    %860 = vmatprep.subr.bf16.mxu0 0
    %861 = vmatpush1.bf16.msra.mxu0 0
    %862 = vmatprep.subr.bf16.mxu0 0
    %863 = vmatpush1.bf16.msra.mxu0 0
    %864 = vmatprep.subr.bf16.mxu0 0
    %865 = vmatpush1.bf16.msra.mxu0 0
    %866 = vmatprep.subr.bf16.mxu0 0
    %867 = vmatpush1.bf16.msra.mxu0 0
    %868 = vmatprep.subr.bf16.mxu0 0
    %869 = vmatpush1.bf16.msra.mxu0 0
    %870 = vmatprep.subr.bf16.mxu0 0
    %871 = vmatpush1.bf16.msra.mxu0 0
    %872 = vmatprep.subr.bf16.mxu0 0
    %873 = vmatpush1.bf16.msra.mxu0 0
    %874 = vmatprep.subr.bf16.mxu0 0
    %875 = vmatpush1.bf16.msra.mxu0 0
    %876 = vmatprep.subr.bf16.mxu0 0
    %877 = vmatpush1.bf16.msra.mxu0 0
    %878 = vmatprep.subr.bf16.mxu0 0
    %879 = vmatpush1.bf16.msra.mxu0 0
    %880 = vmatprep.subr.bf16.mxu0 0
    %881 = vmatpush1.bf16.msra.mxu0 0
    %882 = vmatprep.mubr.bf16.mxu0 0
    %883 = vmatmul.mubr.bf16.gmra.mrb[0].mxu0 %v848
    %v884 = vpop.f32.mrb[0].mxu0
    %v885 = vadd.f32 0.0, %v884
    %v886 = vpop.f32.mrb[0].mxu0
    %v887 = vadd.f32 0.0, %v886
    %v888 = vpop.f32.mrb[0].mxu0
    %v889 = vpop.f32.mrb[0].mxu0
    %890 = vdwg.mxu0
    %v891 = vld [vmem:[#allocation2 + $0xe] sm:$0x3]
    %v892 = vadd.f32 %v891, %v885
    %v893 = vadd.f32 %v887, %v53
    %v894 = vxor.u32 %v893, 2147483648
    %v895 = vmul.f32 %v894, 1.442695
    %v896 = vpow.pop %v895
    %v897 = vadd.f32 %v896, 1.0
    %v898 = vrcp.pop %v897
    %v899 = vmul.f32 1.0, %v898
    %v900 = vtanh.pop %v893
    %v901 = vmul.f32 %v899, %v802
    %903 = vrot.lane.b32.xlu0 %v900, 64
    %v904 = vpop.permute.xlu0 %903
    %v906 = vmul.f32 %v899, %v904
    %908 = vrot.lane.b32.xlu0 %v906, 32
    %v909 = vpop.permute.xlu0 %908
    %v911 = vadd.f32 %v901, %v909
    %v912 = vtanh.pop %v911
    %914 = vrot.lane.b32.xlu0 %v912, 64
    %v915 = vpop.permute.xlu0 %914
    %v917 = vmul.f32 %v899, %v915
    %v918 = vxor.u32 %v892, 2147483648
    %v919 = vmul.f32 %v918, 1.442695
    %v920 = vpow.pop %v919
    %v921 = vadd.f32 %v920, 1.0
    %v922 = vrcp.pop %v921
    %v923 = vmul.f32 1.0, %v922
    %v924 = vtanh.pop %v892
    %v925 = vmul.f32 %v923, %v826
    %927 = vrot.lane.b32.xlu0 %v924, 64
    %v928 = vpop.permute.xlu0 %927
    %v930 = vmul.f32 %v923, %v928
    %932 = vrot.lane.b32.xlu0 %v930, 32
    %v933 = vpop.permute.xlu0 %932
    %v935 = vadd.f32 %v925, %v933
    %v936 = vtanh.pop %v935
    %938 = vrot.lane.b32.xlu0 %v936, 64
    %v939 = vpop.permute.xlu0 %938
    %v941 = vmul.f32 %v923, %v939
    %943 = vrot.lane.b32.xlu0 %v917, 32
    %v944 = vpop.permute.xlu0 %943
    %946 = vst.msk [vmem:[#allocation3 + $0xc] sm:$0x3] %vm291, %v944
    %948 = vrot.lane.b32.xlu0 %v941, 32
    %v949 = vpop.permute.xlu0 %948
    %951 = vrot.lane.b32.xlu0 %v917, 64
    %v952 = vpop.permute.xlu0 %951
    %v954 = vsel %vm73, %v949, %v952
    %v955 = vpack.c.bf16 %v954, %v954
    %v957 = vsel %vm191, %v955, 0
    %959 = vmatprep.subr.bf16.mxu0 %v176
    %960 = vmatpush1.bf16.msra.mxu0 %v175
    %961 = vmatprep.subr.bf16.mxu0 %v178
    %962 = vmatpush1.bf16.msra.mxu0 %v177
    %963 = vmatprep.subr.bf16.mxu0 %v180
    %964 = vmatpush1.bf16.msra.mxu0 %v179
    %965 = vmatprep.subr.bf16.mxu0 %v182
    %966 = vmatpush1.bf16.msra.mxu0 %v181
    %967 = vmatprep.subr.bf16.mxu0 0
    %968 = vmatpush1.bf16.msra.mxu0 0
    %969 = vmatprep.subr.bf16.mxu0 0
    %970 = vmatpush1.bf16.msra.mxu0 0
    %971 = vmatprep.subr.bf16.mxu0 0
    %972 = vmatpush1.bf16.msra.mxu0 0
    %973 = vmatprep.subr.bf16.mxu0 0
    %974 = vmatpush1.bf16.msra.mxu0 0
    %975 = vmatprep.subr.bf16.mxu0 0
    %976 = vmatpush1.bf16.msra.mxu0 0
    %977 = vmatprep.subr.bf16.mxu0 0
    %978 = vmatpush1.bf16.msra.mxu0 0
    %979 = vmatprep.subr.bf16.mxu0 0
    %980 = vmatpush1.bf16.msra.mxu0 0
    %981 = vmatprep.subr.bf16.mxu0 0
    %982 = vmatpush1.bf16.msra.mxu0 0
    %983 = vmatprep.subr.bf16.mxu0 0
    %984 = vmatpush1.bf16.msra.mxu0 0
    %985 = vmatprep.subr.bf16.mxu0 0
    %986 = vmatpush1.bf16.msra.mxu0 0
    %987 = vmatprep.subr.bf16.mxu0 0
    %988 = vmatpush1.bf16.msra.mxu0 0
    %989 = vmatprep.subr.bf16.mxu0 0
    %990 = vmatpush1.bf16.msra.mxu0 0
    %991 = vmatprep.mubr.bf16.mxu0 0
    %992 = vmatmul.mubr.bf16.gmra.mrb[0].mxu0 %v957
    %v993 = vpop.f32.mrb[0].mxu0
    %v994 = vpop.f32.mrb[0].mxu0
    %v995 = vadd.f32 0.0, %v994
    %v996 = vpop.f32.mrb[0].mxu0
    %v997 = vpop.f32.mrb[0].mxu0
    %998 = vdwg.mxu0
    %v999 = vadd.f32 %v995, %v53
    %v1000 = vxor.u32 %v999, 2147483648
    %v1001 = vmul.f32 %v1000, 1.442695
    %v1002 = vpow.pop %v1001
    %v1003 = vadd.f32 %v1002, 1.0
    %v1004 = vrcp.pop %v1003
    %v1005 = vmul.f32 1.0, %v1004
    %v1006 = vtanh.pop %v999
    %v1007 = vmul.f32 %v1005, %v911
    %1009 = vrot.lane.b32.xlu0 %v1006, 64
    %v1010 = vpop.permute.xlu0 %1009
    %v1012 = vmul.f32 %v1005, %v1010
    %1014 = vrot.lane.b32.xlu0 %v1012, 32
    %v1015 = vpop.permute.xlu0 %1014
    %v1017 = vadd.f32 %v1007, %v1015
    %v1018 = vtanh.pop %v1017
    %1020 = vrot.lane.b32.xlu0 %v1018, 64
    %v1021 = vpop.permute.xlu0 %1020
    %v1023 = vmul.f32 %v1005, %v1021
    %1025 = vrot.lane.b32.xlu0 %v1023, 32
    %v1026 = vpop.permute.xlu0 %1025
    %1028 = vst.msk [vmem:[#allocation3 + $0xe] sm:$0x3] %vm291, %v1026
    %v1029 = vld [vmem:[#allocation3] sm:$0xff]
    %v1030 = vld [vmem:[#allocation3 + $0x8] sm:$0xff]
    %v1031 = vpack.c.bf16 %v1030, %v1029
    %v1032 = vlaneseq
    %v1033 = vshrl.u32 %v1032, 7
    %v1034 = vsub.s32 2, %v1033
    %v1035 = vrot.slane %v49, %v1034
    %v1040 = vunpack.c.l.b16 %v41
    %v1041 = vunpack.c.l.b16 %v42
    %v1042 = vunpack.c.l.b16 %v43
    %v1043 = vunpack.c.l.b16 %v44
    %v1044 = vpack.c.b16 %v1041, %v1040
    %v1045 = vpack.c.b16 %v1043, %v1042
    %v1049 = vsel %vm73, %v1031, 0
    %1051 = vmatprep.subr.bf16.mxu0 0
    %1052 = vmatpush1.bf16.msra.mxu0 %v1044
    %1053 = vmatprep.subr.bf16.mxu0 0
    %1054 = vmatpush1.bf16.msra.mxu0 %v1045
    %1055 = vmatprep.subr.bf16.mxu0 0
    %1056 = vmatpush1.bf16.msra.mxu0 0
    %1057 = vmatprep.subr.bf16.mxu0 0
    %1058 = vmatpush1.bf16.msra.mxu0 0
    %1059 = vmatprep.subr.bf16.mxu0 0
    %1060 = vmatpush1.bf16.msra.mxu0 0
    %1061 = vmatprep.subr.bf16.mxu0 0
    %1062 = vmatpush1.bf16.msra.mxu0 0
    %1063 = vmatprep.subr.bf16.mxu0 0
    %1064 = vmatpush1.bf16.msra.mxu0 0
    %1065 = vmatprep.subr.bf16.mxu0 0
    %1066 = vmatpush1.bf16.msra.mxu0 0
    %1067 = vmatprep.subr.bf16.mxu0 0
    %1068 = vmatpush1.bf16.msra.mxu0 0
    %1069 = vmatprep.subr.bf16.mxu0 0
    %1070 = vmatpush1.bf16.msra.mxu0 0
    %1071 = vmatprep.subr.bf16.mxu0 0
    %1072 = vmatpush1.bf16.msra.mxu0 0
    %1073 = vmatprep.subr.bf16.mxu0 0
    %1074 = vmatpush1.bf16.msra.mxu0 0
    %1075 = vmatprep.subr.bf16.mxu0 0
    %1076 = vmatpush1.bf16.msra.mxu0 0
    %1077 = vmatprep.subr.bf16.mxu0 0
    %1078 = vmatpush1.bf16.msra.mxu0 0
    %1079 = vmatprep.subr.bf16.mxu0 0
    %1080 = vmatpush1.bf16.msra.mxu0 0
    %1081 = vmatprep.subr.bf16.mxu0 0
    %1082 = vmatpush1.bf16.msra.mxu0 0
    %1083 = vmatprep.mubr.bf16.mxu0 0
    %1084 = vmatmul.mubr.bf16.gmra.mrb[0].mxu0 %v1049
    %v1085 = vpop.f32.mrb[0].mxu0
    %v1086 = vadd.f32 %v1035, %v1085
    %v1087 = vpop.f32.mrb[0].mxu0
    %v1088 = vpop.f32.mrb[0].mxu0
    %v1089 = vadd.f32 %v1035, %v1088
    %v1090 = vpop.f32.mrb[0].mxu0
    %1091 = vdwg.mxu0
    %v1092 = vtanh.pop %v1086
    %v1093 = vtanh.pop %v1089
    %v1094 = vlaneseq
    %v1095 = vshrl.u32 %v1094, 7
    %v1096 = vsub.s32 3, %v1095
    %v1097 = vrot.slane %v49, %v1096
    %v1098 = vmul.f32 %v1092, %v1097
    %v1099 = vmul.f32 %v1093, %v1097
    %1100 = vadd.xlane.f32.xlu0 %v1098
    %v1101 = vpop.xlane.xlu0 %1100
    %1102 = vadd.xlane.f32.xlu0 %v1099
    %v1103 = vpop.xlane.xlu0 %1102
    %v1105 = vrot.slane %v1101, 2
    %v1107 = vmax.f32 %v1101, %v1105
    %v1108 = vrot.slane %v1101, 4
    %v1110 = vmax.f32 %v1107, %v1108
    %v1111 = vrot.slane %v1101, 6
    %v1113 = vmax.f32 %v1110, %v1111
    %v1114 = vmax.f32 %v1113, %v1103
    %v1116 = vrot.slane %v1103, 2
    %v1118 = vmax.f32 %v1114, %v1116
    %v1119 = vrot.slane %v1103, 4
    %v1121 = vmax.f32 %v1118, %v1119
    %v1122 = vrot.slane %v1103, 6
    %v1124 = vmax.f32 %v1121, %v1122
    %v1125 = vsub.f32 %v1101, %v1124
    %v1126 = vmul.f32 %v1125, 1.442695
    %v1127 = vpow.pop %v1126
    %v1128 = vadd.f32 %v1127, 0.0
    %1130 = vset.pattern.permute.xlu0 0
    %1131 = vperm.xlu0 %1130, %v1127
    %v1132 = vpop.permute.xlu0 %1131
    %v1134 = vmul.f32 %v1132, %v1029
    %v1135 = vadd.f32 %v1134, 0.0
    %v1137 = vrot.slane %v1124, 6
    %v1139 = vsub.f32 %v1101, %v1137
    %v1140 = vmul.f32 %v1139, 1.442695
    %v1141 = vpow.pop %v1140
    %v1143 = vrot.slane %v1141, 2
    %v1145 = vadd.f32 %v1128, %v1143
    %1146 = vset.pattern.permute.xlu0 0
    %1147 = vperm.xlu0 %1146, %v1141
    %v1148 = vpop.permute.xlu0 %1147
    %v1150 = vmul.f32 %v1148, %v1029
    %v1152 = vrot.slane %v1150, 2
    %v1154 = vadd.f32 %v1135, %v1152
    %v1155 = vrot.slane %v1124, 4
    %v1157 = vsub.f32 %v1101, %v1155
    %v1158 = vmul.f32 %v1157, 1.442695
    %v1159 = vpow.pop %v1158
    %v1161 = vrot.slane %v1159, 4
    %v1163 = vadd.f32 %v1145, %v1161
    %1164 = vset.pattern.permute.xlu0 0
    %1165 = vperm.xlu0 %1164, %v1159
    %v1166 = vpop.permute.xlu0 %1165
    %v1168 = vmul.f32 %v1166, %v1029
    %v1170 = vrot.slane %v1168, 4
    %v1172 = vadd.f32 %v1154, %v1170
    %v1173 = vrot.slane %v1124, 2
    %v1175 = vsub.f32 %v1101, %v1173
    %v1176 = vmul.f32 %v1175, 1.442695
    %v1177 = vpow.pop %v1176
    %v1179 = vrot.slane %v1177, 6
    %v1181 = vadd.f32 %v1163, %v1179
    %1182 = vset.pattern.permute.xlu0 0
    %1183 = vperm.xlu0 %1182, %v1177
    %v1184 = vpop.permute.xlu0 %1183
    %v1186 = vmul.f32 %v1184, %v1029
    %v1188 = vrot.slane %v1186, 6
    %v1190 = vadd.f32 %v1172, %v1188
    %v1191 = vsub.f32 %v1103, %v1124
    %v1192 = vmul.f32 %v1191, 1.442695
    %v1193 = vpow.pop %v1192
    %v1194 = vadd.f32 %v1181, %v1193
    %1196 = vset.pattern.permute.xlu0 0
    %1197 = vperm.xlu0 %1196, %v1193
    %v1198 = vpop.permute.xlu0 %1197
    %v1200 = vmul.f32 %v1198, %v1030
    %v1201 = vadd.f32 %v1190, %v1200
    %v1202 = vsub.f32 %v1103, %v1137
    %v1203 = vmul.f32 %v1202, 1.442695
    %v1204 = vpow.pop %v1203
    %v1206 = vrot.slane %v1204, 2
    %v1208 = vadd.f32 %v1194, %v1206
    %1209 = vset.pattern.permute.xlu0 0
    %1210 = vperm.xlu0 %1209, %v1204
    %v1211 = vpop.permute.xlu0 %1210
    %v1213 = vmul.f32 %v1211, %v1030
    %v1215 = vrot.slane %v1213, 2
    %v1217 = vadd.f32 %v1201, %v1215
    %v1218 = vsub.f32 %v1103, %v1155
    %v1219 = vmul.f32 %v1218, 1.442695
    %v1220 = vpow.pop %v1219
    %v1222 = vrot.slane %v1220, 4
    %v1224 = vadd.f32 %v1208, %v1222
    %1225 = vset.pattern.permute.xlu0 0
    %1226 = vperm.xlu0 %1225, %v1220
    %v1227 = vpop.permute.xlu0 %1226
    %v1229 = vmul.f32 %v1227, %v1030
    %v1231 = vrot.slane %v1229, 4
    %v1233 = vadd.f32 %v1217, %v1231
    %v1234 = vsub.f32 %v1103, %v1173
    %v1235 = vmul.f32 %v1234, 1.442695
    %v1236 = vpow.pop %v1235
    %v1238 = vrot.slane %v1236, 6
    %v1240 = vadd.f32 %v1224, %v1238
    %1241 = vset.pattern.permute.xlu0 0
    %1242 = vperm.xlu0 %1241, %v1236
    %v1243 = vpop.permute.xlu0 %1242
    %v1245 = vmul.f32 %v1243, %v1030
    %v1247 = vrot.slane %v1245, 6
    %v1249 = vadd.f32 %v1233, %v1247
    %1251 = vset.pattern.permute.xlu0 0
    %1252 = vperm.xlu0 %1251, %v1240
    %v1253 = vpop.permute.xlu0 %1252
    %v1255 = vrcp.pop %v1253
    %v1256 = vmul.f32 %v1249, %v1255
    %v1257 = vpack.c.bf16 %v1256, %v1256
    %v1258 = vlaneseq
    %v1259 = vshrl.u32 %v1258, 7
    %v1260 = vsub.s32 4, %v1259
    %v1261 = vrot.slane %v49, %v1260
    %v1266 = vunpack.c.l.b16 %v45
    %v1267 = vunpack.c.l.b16 %v46
    %v1268 = vunpack.c.l.b16 %v47
    %v1269 = vunpack.c.l.b16 %v48
    %v1270 = vpack.c.b16 %v1267, %v1266
    %v1271 = vpack.c.b16 %v1269, %v1268
    %v1275 = vsel %vm73, %v1257, 0
    %1277 = vmatprep.subr.bf16.mxu0 0
    %1278 = vmatpush1.bf16.msra.mxu0 %v1270
    %1279 = vmatprep.subr.bf16.mxu0 0
    %1280 = vmatpush1.bf16.msra.mxu0 %v1271
    %1281 = vmatprep.subr.bf16.mxu0 0
    %1282 = vmatpush1.bf16.msra.mxu0 0
    %1283 = vmatprep.subr.bf16.mxu0 0
    %1284 = vmatpush1.bf16.msra.mxu0 0
    %1285 = vmatprep.subr.bf16.mxu0 0
    %1286 = vmatpush1.bf16.msra.mxu0 0
    %1287 = vmatprep.subr.bf16.mxu0 0
    %1288 = vmatpush1.bf16.msra.mxu0 0
    %1289 = vmatprep.subr.bf16.mxu0 0
    %1290 = vmatpush1.bf16.msra.mxu0 0
    %1291 = vmatprep.subr.bf16.mxu0 0
    %1292 = vmatpush1.bf16.msra.mxu0 0
    %1293 = vmatprep.subr.bf16.mxu0 0
    %1294 = vmatpush1.bf16.msra.mxu0 0
    %1295 = vmatprep.subr.bf16.mxu0 0
    %1296 = vmatpush1.bf16.msra.mxu0 0
    %1297 = vmatprep.subr.bf16.mxu0 0
    %1298 = vmatpush1.bf16.msra.mxu0 0
    %1299 = vmatprep.subr.bf16.mxu0 0
    %1300 = vmatpush1.bf16.msra.mxu0 0
    %1301 = vmatprep.subr.bf16.mxu0 0
    %1302 = vmatpush1.bf16.msra.mxu0 0
    %1303 = vmatprep.subr.bf16.mxu0 0
    %1304 = vmatpush1.bf16.msra.mxu0 0
    %1305 = vmatprep.subr.bf16.mxu0 0
    %1306 = vmatpush1.bf16.msra.mxu0 0
    %1307 = vmatprep.subr.bf16.mxu0 0
    %1308 = vmatpush1.bf16.msra.mxu0 0
    %1309 = vmatprep.mubr.bf16.mxu0 0
    %1310 = vmatmul.mubr.bf16.gmra.mrb[0].mxu0 %v1275
    %v1311 = vpop.f32.mrb[0].mxu0
    %v1312 = vadd.f32 %v1261, %v1311
    %v1313 = vpop.f32.mrb[0].mxu0
    %v1314 = vpop.f32.mrb[0].mxu0
    %v1315 = vpop.f32.mrb[0].mxu0
    %1316 = vdwg.mxu0
    %v1317 = vmax.f32 %v1312, 0.0
    %v1318 = vlaneseq
    %v1319 = vshrl.u32 %v1318, 7
    %v1320 = vsub.s32 5, %v1319
    %v1321 = vrot.slane %v49, %v1320
    %v1322 = vmul.f32 %v1317, %v1321
    %vm1323 = vcmask 1041408
    %v1324 = vsel %vm1323, %v1322, 0.0
    %1325 = vadd.xlane.f32.xlu0 %v1324
    %v1326 = vpop.xlane.xlu0 %1325
    %v1327 = vlaneseq
    %v1328 = vshrl.u32 %v1327, 7
    %v1329 = vsub.s32 6, %v1328
    %v1330 = vrot.slane %v49, %v1329
    %v1331 = vadd.f32 %v1326, %v1330
    %v1332 = vxor.u32 %v1331, 2147483648
    %v1333 = vmul.f32 %v1332, 1.442695
    %v1334 = vpow.pop %v1333
    %v1335 = vadd.f32 %v1334, 1.0
    %v1336 = vrcp.pop %v1335
    %v1337 = vmul.f32 1.0, %v1336
    %vm1338 = vcmask 1024
    %1339 = vst.msk [vmem:[%s3] sm:$0x3] %vm1338, %v1337
    // Predicated region
    $region18: #{fall_detection_forward.1} parent=1 // pred_check
      _
    $region19: #{fall_detection_forward.1} parent=1 // pred_check_branch
      %1341 = sbr.rel (0) target = $region21
    $region20: #{fall_detection_forward.1} parent=1 // pred_region
      _
    $region21: #{fall_detection_forward.1} parent=1 // pred_fallthru
      _
    // Predicated region
    $region22: #{fall_detection_forward.1} parent=1 // pred_check
      _
    $region23: #{fall_detection_forward.1} parent=1 // pred_check_branch
      %1343 = sbr.rel (0) target = $region25
    $region24: #{fall_detection_forward.1} parent=1 // pred_region
      _
    $region25: #{fall_detection_forward.1} parent=1 // pred_fallthru
      _
    %1344 = vsyncpa [#allocation5], 1

</llo_original>
